<compile_context>
chip_gen: v6e
topology: v6e:2x2x1
jax: 0.10.0
libtpu: 0.0.40
codegen_flags: <defaults>
</compile_context>

<pallas_src>
import functools

import jax
import jax.numpy as jnp
from jax import lax
from jax.experimental import pallas as pl
from jax.experimental.pallas import tpu as pltpu


def _lstm_wrapper_kernel(xd_ref, xs_ref, wd_ref, ws_ref, b_ref, whh_ref,
                         whead_ref, bhead_ref, out_ref,
                         pre_scr, h_scr, c_scr,
                         *, hidden_size, chunk_len, n_interleave, unroll):
    """One (batch block, time chunk) grid step of the LSTM wrapper."""
    H = hidden_size
    Tc = chunk_len
    Bb = xs_ref.shape[0]
    Dd = xd_ref.shape[-1]
    sub = Bb // n_interleave

    t_chunk = pl.program_id(1)
    n_chunks = pl.num_programs(1)

    # ---- init carried state at the first time chunk -------------------------
    @pl.when(t_chunk == 0)
    def _():
        h_scr[...] = jnp.zeros_like(h_scr)
        c_scr[...] = jnp.zeros_like(c_scr)

    # ---- hoisted work (off the serial h->h chain) ----------------------------
    # Static-feature projection + bias (tiny, recomputed per chunk).
    xs_proj = (jnp.dot(xs_ref[...], ws_ref[...],
                       preferred_element_type=jnp.float32)
               + b_ref[...])                                    # [Bb, 4H]

    # Fused dynamic projection for the whole chunk: one long MXU push with
    # M = Tc*Bb instead of Tc small matmuls.
    xd_flat = xd_ref[...].reshape(Tc * Bb, Dd)
    proj = jnp.dot(xd_flat, wd_ref[...],
                   preferred_element_type=jnp.float32)          # [Tc*Bb, 4H]
    pre_scr[...] = (proj.reshape(Tc, Bb, 4 * H)
                    + xs_proj[None, :, :]).astype(pre_scr.dtype)

    w_hh = whh_ref[...]        # [H, 4H]; optionally bf16 (MXU native v6e/v7x)

    # ---- recurrence: register-carried h/c, one matmul per step per chain ----
    # Gate columns are pre-permuted to (i, f, o, g): one contiguous sigmoid
    # over [:, :3H], one tanh over [:, 3H:].
    def gate_math(gates, c):
        sig = jax.nn.sigmoid(gates[:, :3 * H])
        g_g = jnp.tanh(gates[:, 3 * H:])
        i_g = sig[:, :H]
        f_g = sig[:, H:2 * H]
        o_g = sig[:, 2 * H:3 * H]
        c_new = f_g * c + i_g * g_g
        h_new = o_g * jnp.tanh(c_new)
        return h_new, c_new

    def step(t, carry):
        hs, cs = carry
        pre_t = pre_scr[t]                                      # [Bb, 4H]
        new_h, new_c = [], []
        # Independent sub-block chains: one chain's VPU/EUP gate math overlaps
        # the other chain's MXU push/drain.
        for k in range(n_interleave):
            lo = k * sub
            pre_k = pre_t[lo:lo + sub, :].astype(jnp.float32)
            gates = pre_k + jnp.dot(hs[k].astype(w_hh.dtype), w_hh,
                                    preferred_element_type=jnp.float32)
            h_new, c_new = gate_math(gates, cs[k])
            new_h.append(h_new)
            new_c.append(c_new)
        return tuple(new_h), tuple(new_c)

    h_full = h_scr[...]
    c_full = c_scr[...]
    h0 = tuple(h_full[k * sub:(k + 1) * sub, :] for k in range(n_interleave))
    c0 = tuple(c_full[k * sub:(k + 1) * sub, :] for k in range(n_interleave))

    hs, cs = lax.fori_loop(0, Tc, step, (h0, c0), unroll=unroll)

    h_out = hs[0] if n_interleave == 1 else jnp.concatenate(hs, axis=0)
    c_out = cs[0] if n_interleave == 1 else jnp.concatenate(cs, axis=0)
    h_scr[...] = h_out
    c_scr[...] = c_out

    # ---- head at the final time chunk: y_hat[:, -1, 0].unsqueeze(1) ---------
    # VPU multiply + lane reduction (w_head supplied as a [1, H] row) instead
    # of a 1-wide MXU matmul.
    @pl.when(t_chunk == n_chunks - 1)
    def _():
        out_ref[...] = (jnp.sum(h_out * whead_ref[...], axis=-1, keepdims=True)
                        + bhead_ref[...]).astype(out_ref.dtype)


def _largest_divisor_leq(n, cap):
    best = 1
    for d in range(1, min(n, cap) + 1):
        if n % d == 0:
            best = d
    return best


def wrapped_model_forward(inputs, params, *, seq_length, num_dynamic,
                          num_static, hidden_size,
                          recurrent_matmul_dtype=jnp.float32,
                          proj_scratch_dtype=jnp.float32,
                          block_batch=None, time_chunk=None, interleave=None):
    """JAX glue reproducing WrappedModel.forward semantics."""
    batch = inputs.shape[0]
    S, Dd, Ds, H = seq_length, num_dynamic, num_static, hidden_size

    # Split exactly as the PyTorch wrapper does.
    x_d = inputs[:, : S * Dd].reshape(batch, S, Dd)
    x_s = inputs[:, S * Dd:]
    x_d_tm = jnp.transpose(x_d, (1, 0, 2))            # time-major [S, B, Dd]

    # Gate-order permutation (i, f, g, o) -> (i, f, o, g) so the kernel can
    # apply one sigmoid over a contiguous 3H slice and one tanh over H.
    def perm_gates(w):
        return jnp.concatenate(
            [w[..., :2 * H], w[..., 3 * H:4 * H], w[..., 2 * H:3 * H]], axis=-1)

    w_ih = perm_gates(params["w_ih"])
    w_d = w_ih[:Dd, :]                                # [Dd, 4H]
    w_s = w_ih[Dd:, :]                                # [Ds, 4H]
    bias = perm_gates(params["b"])                    # [1, 4H]
    w_hh = perm_gates(params["w_hh"]).astype(recurrent_matmul_dtype)  # [H, 4H]
    w_head_row = params["w_head"].reshape(1, H)       # head as a row (VPU reduce)
    b_head = params["b_head"]                         # [1, 1]

    # ---- batch tile: MXU-friendly default (256 / 128), must divide batch ----
    if block_batch is None:
        block_batch = batch
        for cand in (256, 128):
            if batch % cand == 0:
                block_batch = cand
                break
    assert batch % block_batch == 0, "block_batch must divide batch"
    assert block_batch == batch or block_batch % 8 == 0, \
        "block_batch must be a multiple of 8 (or the full batch)"
    n_b = batch // block_batch

    # ---- time chunk: bounds the projection scratch & pipelines x_d DMA ------
    if time_chunk is None:
        if S <= 64:
            time_chunk = S
        else:
            time_chunk = _largest_divisor_leq(S, 64)
            if time_chunk < 8:            # degenerate divisor; keep full seq
                time_chunk = S
    assert S % time_chunk == 0, "time_chunk must divide seq_length"
    n_t = S // time_chunk

    # ---- 2-way batch interleave inside the recurrence ------------------------
    if interleave is None:
        interleave = 2 if (block_batch >= 16 and block_batch % 16 == 0) else 1
    assert block_batch % interleave == 0

    unroll = True if time_chunk <= 16 else 8

    # ---- VMEM budget hint (default scoped limit is only 32 MiB) -------------
    f32 = 4
    pre_bytes = time_chunk * block_batch * 4 * H * jnp.dtype(proj_scratch_dtype).itemsize
    state_bytes = 2 * block_batch * H * f32
    xd_bytes = 2 * time_chunk * block_batch * Dd * f32          # double-buffered
    xs_bytes = 2 * block_batch * Ds * f32
    w_bytes = 2 * ((Dd + Ds) * 4 * H * f32 + H * 4 * H *
                   jnp.dtype(recurrent_matmul_dtype).itemsize + 4 * H * f32 + H * f32)
    est = pre_bytes + state_bytes + xd_bytes + xs_bytes + w_bytes + (1 << 20)
    vmem_limit = int(min(110 * 2**20, max(32 * 2**20, 2 * est)))

    kernel = functools.partial(_lstm_wrapper_kernel,
                               hidden_size=H, chunk_len=time_chunk,
                               n_interleave=interleave, unroll=unroll)

    def const_spec(shape):
        return pl.BlockSpec(shape, lambda i, j: (0,) * len(shape))

    out = pl.pallas_call(
        kernel,
        out_shape=jax.ShapeDtypeStruct((batch, 1), jnp.float32),
        grid=(n_b, n_t),
        in_specs=[
            pl.BlockSpec((time_chunk, block_batch, Dd),
                         lambda i, j: (j, i, 0)),                 # x_d chunk
            pl.BlockSpec((block_batch, Ds), lambda i, j: (i, 0)),  # x_s
            const_spec((Dd, 4 * H)),                               # w_d
            const_spec((Ds, 4 * H)),                               # w_s
            const_spec((1, 4 * H)),                                # bias
            const_spec((H, 4 * H)),                                # w_hh
            const_spec((1, H)),                                    # w_head row
            const_spec((1, 1)),                                    # b_head
        ],
        out_specs=pl.BlockSpec((block_batch, 1), lambda i, j: (i, 0)),
        scratch_shapes=[
            pltpu.VMEM((time_chunk, block_batch, 4 * H), proj_scratch_dtype),
            pltpu.VMEM((block_batch, H), jnp.float32),   # h carried across chunks
            pltpu.VMEM((block_batch, H), jnp.float32),   # c carried across chunks
        ],
        compiler_params=pltpu.CompilerParams(
            dimension_semantics=("parallel", "arbitrary"),
            vmem_limit_bytes=vmem_limit),
    )(x_d_tm, x_s, w_d, w_s, bias, w_hh, w_head_row, b_head)
    return out


def _reference_forward(inputs, params, *, seq_length, num_dynamic,
                       num_static, hidden_size):
    """Pure-JAX reference (canonical gate order i, f, g, o)."""
    batch = inputs.shape[0]
    H = hidden_size
    x_d = inputs[:, : seq_length * num_dynamic].reshape(
        batch, seq_length, num_dynamic)
    x_s = inputs[:, seq_length * num_dynamic:]
    h = jnp.zeros((batch, H), jnp.float32)
    c = jnp.zeros((batch, H), jnp.float32)
    for t in range(seq_length):
        x_t = jnp.concatenate([x_d[:, t, :], x_s], axis=-1)
        gates = x_t @ params["w_ih"] + h @ params["w_hh"] + params["b"]
        i_g = jax.nn.sigmoid(gates[:, 0 * H:1 * H])
        f_g = jax.nn.sigmoid(gates[:, 1 * H:2 * H])
        g_g = jnp.tanh(gates[:, 2 * H:3 * H])
        o_g = jax.nn.sigmoid(gates[:, 3 * H:4 * H])
        c = f_g * c + i_g * g_g
        h = o_g * jnp.tanh(c)
    return h @ params["w_head"] + params["b_head"]


def _make_params(key, d_in, hidden_size):
    k1, k2, k3, k4, k5 = jax.random.split(key, 5)
    scale = 0.1
    return {
        "w_ih": scale * jax.random.normal(k1, (d_in, 4 * hidden_size), jnp.float32),
        "w_hh": scale * jax.random.normal(k2, (hidden_size, 4 * hidden_size), jnp.float32),
        "b": scale * jax.random.normal(k3, (1, 4 * hidden_size), jnp.float32),
        "w_head": scale * jax.random.normal(k4, (hidden_size, 1), jnp.float32),
        "b_head": scale * jax.random.normal(k5, (1, 1), jnp.float32),
    }


if __name__ == "__main__":
    key = jax.random.PRNGKey(0)
    k_a, k_b, k_pa, k_pb = jax.random.split(key, 4)

    # ---- config A: shapes implied by the wrapper's forward (single chunk) ---
    batch, seq_length, num_dynamic, num_static, hidden_size = 8, 8, 4, 4, 32
    d_in = num_dynamic + num_static
    inputs = jax.random.normal(
        k_a, (batch, seq_length * num_dynamic + num_static), jnp.float32)
    params = _make_params(k_pa, d_in, hidden_size)

    ref = _reference_forward(
        inputs, params, seq_length=seq_length, num_dynamic=num_dynamic,
        num_static=num_static, hidden_size=hidden_size)

    out_f32 = wrapped_model_forward(
        inputs, params, seq_length=seq_length, num_dynamic=num_dynamic,
        num_static=num_static, hidden_size=hidden_size,
        recurrent_matmul_dtype=jnp.float32)
    out_f32 = jax.block_until_ready(out_f32)
    assert out_f32.shape == (batch, 1), out_f32.shape
    assert jnp.allclose(out_f32, ref, atol=1e-5, rtol=1e-5), (out_f32, ref)

    # bf16 recurrent matmul (opt-in; recommended on v6e/v7x): looser tolerance.
    out_bf16 = wrapped_model_forward(
        inputs, params, seq_length=seq_length, num_dynamic=num_dynamic,
        num_static=num_static, hidden_size=hidden_size,
        recurrent_matmul_dtype=jnp.bfloat16)
    out_bf16 = jax.block_until_ready(out_bf16)
    assert out_bf16.shape == (batch, 1), out_bf16.shape
    assert jnp.allclose(out_bf16, ref, atol=3e-2, rtol=0.0), (out_bf16, ref)

    # ---- config B: exercises multi-chunk carry + 2-way batch interleave -----
    batch_b, seq_b, dd_b, ds_b, h_b = 16, 12, 3, 5, 32
    inputs_b = jax.random.normal(
        k_b, (batch_b, seq_b * dd_b + ds_b), jnp.float32)
    params_b = _make_params(k_pb, dd_b + ds_b, h_b)

    ref_b = _reference_forward(
        inputs_b, params_b, seq_length=seq_b, num_dynamic=dd_b,
        num_static=ds_b, hidden_size=h_b)
    out_b = wrapped_model_forward(
        inputs_b, params_b, seq_length=seq_b, num_dynamic=dd_b,
        num_static=ds_b, hidden_size=h_b, time_chunk=4)
    out_b = jax.block_until_ready(out_b)
    assert out_b.shape == (batch_b, 1), out_b.shape
    assert jnp.allclose(out_b, ref_b, atol=1e-5, rtol=1e-5), (out_b, ref_b)

    print("KERNEL_OK")
</pallas_src>

<mosaic_0001>
module attributes {stable_mosaic.version = 11 : i64} {
  func.func @_lstm_wrapper_kernel(%arg0: i32, %arg1: i32, %arg2: memref<8x8x4xf32, #tpu.memory_space<vmem>>, %arg3: memref<8x4xf32, #tpu.memory_space<vmem>>, %arg4: memref<4x128xf32, #tpu.memory_space<vmem>>, %arg5: memref<4x128xf32, #tpu.memory_space<vmem>>, %arg6: memref<1x128xf32, #tpu.memory_space<vmem>>, %arg7: memref<32x128xf32, #tpu.memory_space<vmem>>, %arg8: memref<1x32xf32, #tpu.memory_space<vmem>>, %arg9: memref<1x1xf32, #tpu.memory_space<vmem>>, %arg10: memref<8x1xf32, #tpu.memory_space<vmem>>, %arg11: memref<8x8x128xf32, #tpu.memory_space<vmem>>, %arg12: memref<8x32xf32, #tpu.memory_space<vmem>>, %arg13: memref<8x32xf32, #tpu.memory_space<vmem>>) attributes {dimension_semantics = [#tpu.dimension_semantics<parallel>, #tpu.dimension_semantics<arbitrary>], iteration_bounds = array<i64: 1, 1>, scalar_prefetch = 0 : i64, scratch_operands = 3 : i64, tpu.core_type = #tpu.core_type<tc>, window_params = [{transform_indices = @transform_0, window_bounds = array<i64: 8, 8, 4>}, {transform_indices = @transform_1, window_bounds = array<i64: 8, 4>}, {pipeline_mode = #tpu.pipeline_mode<synchronous>, transform_indices = @transform_2, window_bounds = array<i64: 4, 128>}, {pipeline_mode = #tpu.pipeline_mode<synchronous>, transform_indices = @transform_3, window_bounds = array<i64: 4, 128>}, {pipeline_mode = #tpu.pipeline_mode<synchronous>, transform_indices = @transform_4, window_bounds = array<i64: 1, 128>}, {pipeline_mode = #tpu.pipeline_mode<synchronous>, transform_indices = @transform_5, window_bounds = array<i64: 32, 128>}, {pipeline_mode = #tpu.pipeline_mode<synchronous>, transform_indices = @transform_6, window_bounds = array<i64: 1, 32>}, {pipeline_mode = #tpu.pipeline_mode<synchronous>, transform_indices = @transform_7, window_bounds = array<i64: 1, 1>}, {transform_indices = @transform_8, window_bounds = array<i64: 8, 1>}]} {
    %c0_i32 = arith.constant 0 : i32
    %0 = arith.cmpi eq, %arg1, %c0_i32 : i32
    %1 = arith.extui %0 : i1 to i32
    %c0_i32_0 = arith.constant 0 : i32
    %2 = arith.cmpi ne, %1, %c0_i32_0 : i32
    scf.if %2 {
      %cst_60 = arith.constant 0.000000e+00 : f32
      %194 = vector.broadcast %cst_60 : f32 to vector<8x32xf32>
      %c0_61 = arith.constant 0 : index
      %c0_62 = arith.constant 0 : index
      %195 = vector.load %arg12[%c0_61, %c0_62] : memref<8x32xf32, #tpu.memory_space<vmem>>, vector<8x32xf32>
      tpu.vector_store %arg12[%c0_61, %c0_62], %194 {strides = array<i32>} : memref<8x32xf32, #tpu.memory_space<vmem>>, vector<8x32xf32>,
      %cst_63 = arith.constant 0.000000e+00 : f32
      %196 = vector.broadcast %cst_63 : f32 to vector<8x32xf32>
      %c0_64 = arith.constant 0 : index
      %c0_65 = arith.constant 0 : index
      %197 = vector.load %arg13[%c0_64, %c0_65] : memref<8x32xf32, #tpu.memory_space<vmem>>, vector<8x32xf32>
      tpu.vector_store %arg13[%c0_64, %c0_65], %196 {strides = array<i32>} : memref<8x32xf32, #tpu.memory_space<vmem>>, vector<8x32xf32>,
    } else {
    }
    %c0 = arith.constant 0 : index
    %c0_1 = arith.constant 0 : index
    %3 = vector.load %arg3[%c0, %c0_1] : memref<8x4xf32, #tpu.memory_space<vmem>>, vector<8x4xf32>
    %c0_2 = arith.constant 0 : index
    %c0_3 = arith.constant 0 : index
    %4 = vector.load %arg5[%c0_2, %c0_3] : memref<4x128xf32, #tpu.memory_space<vmem>>, vector<4x128xf32>
    %cst = arith.constant dense<0.000000e+00> : vector<8x128xf32>
    %5 = tpu.matmul %3, %4, %cst {dimension_numbers = #tpu.dot_dimension_numbers<[1], [0], [0], [1], [0, 0, 1, 1], [], []>} : vector<8x4xf32>, vector<4x128xf32>, vector<8x128xf32> -> vector<8x128xf32>
    %c0_4 = arith.constant 0 : index
    %c0_5 = arith.constant 0 : index
    %6 = vector.load %arg6[%c0_4, %c0_5] : memref<1x128xf32, #tpu.memory_space<vmem>>, vector<1x128xf32>
    %7 = vector.broadcast %6 : vector<1x128xf32> to vector<8x128xf32>
    %8 = arith.addf %5, %7 : vector<8x128xf32>
    %c0_6 = arith.constant 0 : index
    %c0_7 = arith.constant 0 : index
    %c0_8 = arith.constant 0 : index
    %9 = vector.load %arg2[%c0_6, %c0_7, %c0_8] : memref<8x8x4xf32, #tpu.memory_space<vmem>>, vector<8x8x4xf32>
    %10 = vector.shape_cast %9 : vector<8x8x4xf32> to vector<64x4xf32>
    %c0_9 = arith.constant 0 : index
    %c0_10 = arith.constant 0 : index
    %11 = vector.load %arg4[%c0_9, %c0_10] : memref<4x128xf32, #tpu.memory_space<vmem>>, vector<4x128xf32>
    %cst_11 = arith.constant dense<0.000000e+00> : vector<64x128xf32>
    %12 = tpu.matmul %10, %11, %cst_11 {dimension_numbers = #tpu.dot_dimension_numbers<[1], [0], [0], [1], [0, 0, 1, 1], [], []>} : vector<64x4xf32>, vector<4x128xf32>, vector<64x128xf32> -> vector<64x128xf32>
    %13 = vector.shape_cast %12 : vector<64x128xf32> to vector<8x8x128xf32>
    %14 = vector.shape_cast %8 : vector<8x128xf32> to vector<1x8x128xf32>
    %15 = vector.broadcast %14 : vector<1x8x128xf32> to vector<8x8x128xf32>
    %16 = arith.addf %13, %15 : vector<8x8x128xf32>
    %c0_12 = arith.constant 0 : index
    %c0_13 = arith.constant 0 : index
    %c0_14 = arith.constant 0 : index
    %17 = vector.load %arg11[%c0_12, %c0_13, %c0_14] : memref<8x8x128xf32, #tpu.memory_space<vmem>>, vector<8x8x128xf32>
    tpu.vector_store %arg11[%c0_12, %c0_13, %c0_14], %16 {strides = array<i32>} : memref<8x8x128xf32, #tpu.memory_space<vmem>>, vector<8x8x128xf32>,
    %c0_15 = arith.constant 0 : index
    %c0_16 = arith.constant 0 : index
    %18 = vector.load %arg7[%c0_15, %c0_16] : memref<32x128xf32, #tpu.memory_space<vmem>>, vector<32x128xf32>
    %c0_17 = arith.constant 0 : index
    %c0_18 = arith.constant 0 : index
    %19 = vector.load %arg12[%c0_17, %c0_18] : memref<8x32xf32, #tpu.memory_space<vmem>>, vector<8x32xf32>
    %c0_19 = arith.constant 0 : index
    %c0_20 = arith.constant 0 : index
    %20 = vector.load %arg13[%c0_19, %c0_20] : memref<8x32xf32, #tpu.memory_space<vmem>>, vector<8x32xf32>
    %c0_i32_21 = arith.constant 0 : i32
    %21 = arith.index_cast %c0_i32_21 : i32 to index
    %c0_22 = arith.constant 0 : index
    %c0_23 = arith.constant 0 : index
    %22 = vector.load %arg11[%21, %c0_22, %c0_23] : memref<8x8x128xf32, #tpu.memory_space<vmem>>, vector<1x8x128xf32>
    %23 = vector.shape_cast %22 : vector<1x8x128xf32> to vector<8x128xf32>
    %cst_24 = arith.constant dense<0.000000e+00> : vector<8x128xf32>
    %24 = tpu.matmul %19, %18, %cst_24 {dimension_numbers = #tpu.dot_dimension_numbers<[1], [0], [0], [1], [0, 0, 1, 1], [], []>} : vector<8x32xf32>, vector<32x128xf32>, vector<8x128xf32> -> vector<8x128xf32>
    %25 = arith.addf %23, %24 : vector<8x128xf32>
    %26 = vector.extract_strided_slice %25 {offsets = [0, 0], sizes = [8, 96], strides = [1, 1]} : vector<8x128xf32> to vector<8x96xf32>
    %27 = arith.negf %26 : vector<8x96xf32>
    %28 = math.exp %27 : vector<8x96xf32>
    %cst_25 = arith.constant 1.000000e+00 : f32
    %29 = vector.broadcast %cst_25 : f32 to vector<8x96xf32>
    %30 = arith.addf %29, %28 : vector<8x96xf32>
    %31 = arith.divf %29, %30 : vector<8x96xf32>
    %32 = vector.extract_strided_slice %25 {offsets = [0, 96], sizes = [8, 32], strides = [1, 1]} : vector<8x128xf32> to vector<8x32xf32>
    %33 = math.tanh %32 : vector<8x32xf32>
    %34 = vector.extract_strided_slice %31 {offsets = [0, 0], sizes = [8, 32], strides = [1, 1]} : vector<8x96xf32> to vector<8x32xf32>
    %35 = vector.extract_strided_slice %31 {offsets = [0, 32], sizes = [8, 32], strides = [1, 1]} : vector<8x96xf32> to vector<8x32xf32>
    %36 = vector.extract_strided_slice %31 {offsets = [0, 64], sizes = [8, 32], strides = [1, 1]} : vector<8x96xf32> to vector<8x32xf32>
    %37 = arith.mulf %35, %20 : vector<8x32xf32>
    %38 = arith.mulf %34, %33 : vector<8x32xf32>
    %39 = arith.addf %37, %38 : vector<8x32xf32>
    %40 = math.tanh %39 : vector<8x32xf32>
    %41 = arith.mulf %36, %40 : vector<8x32xf32>
    %c1_i32 = arith.constant 1 : i32
    %42 = arith.index_cast %c1_i32 : i32 to index
    %c0_26 = arith.constant 0 : index
    %c0_27 = arith.constant 0 : index
    %43 = vector.load %arg11[%42, %c0_26, %c0_27] : memref<8x8x128xf32, #tpu.memory_space<vmem>>, vector<1x8x128xf32>
    %44 = vector.shape_cast %43 : vector<1x8x128xf32> to vector<8x128xf32>
    %cst_28 = arith.constant dense<0.000000e+00> : vector<8x128xf32>
    %45 = tpu.matmul %41, %18, %cst_28 {dimension_numbers = #tpu.dot_dimension_numbers<[1], [0], [0], [1], [0, 0, 1, 1], [], []>} : vector<8x32xf32>, vector<32x128xf32>, vector<8x128xf32> -> vector<8x128xf32>
    %46 = arith.addf %44, %45 : vector<8x128xf32>
    %47 = vector.extract_strided_slice %46 {offsets = [0, 0], sizes = [8, 96], strides = [1, 1]} : vector<8x128xf32> to vector<8x96xf32>
    %48 = arith.negf %47 : vector<8x96xf32>
    %49 = math.exp %48 : vector<8x96xf32>
    %cst_29 = arith.constant 1.000000e+00 : f32
    %50 = vector.broadcast %cst_29 : f32 to vector<8x96xf32>
    %51 = arith.addf %50, %49 : vector<8x96xf32>
    %52 = arith.divf %50, %51 : vector<8x96xf32>
    %53 = vector.extract_strided_slice %46 {offsets = [0, 96], sizes = [8, 32], strides = [1, 1]} : vector<8x128xf32> to vector<8x32xf32>
    %54 = math.tanh %53 : vector<8x32xf32>
    %55 = vector.extract_strided_slice %52 {offsets = [0, 0], sizes = [8, 32], strides = [1, 1]} : vector<8x96xf32> to vector<8x32xf32>
    %56 = vector.extract_strided_slice %52 {offsets = [0, 32], sizes = [8, 32], strides = [1, 1]} : vector<8x96xf32> to vector<8x32xf32>
    %57 = vector.extract_strided_slice %52 {offsets = [0, 64], sizes = [8, 32], strides = [1, 1]} : vector<8x96xf32> to vector<8x32xf32>
    %58 = arith.mulf %56, %39 : vector<8x32xf32>
    %59 = arith.mulf %55, %54 : vector<8x32xf32>
    %60 = arith.addf %58, %59 : vector<8x32xf32>
    %61 = math.tanh %60 : vector<8x32xf32>
    %62 = arith.mulf %57, %61 : vector<8x32xf32>
    %c2_i32 = arith.constant 2 : i32
    %63 = arith.index_cast %c2_i32 : i32 to index
    %c0_30 = arith.constant 0 : index
    %c0_31 = arith.constant 0 : index
    %64 = vector.load %arg11[%63, %c0_30, %c0_31] : memref<8x8x128xf32, #tpu.memory_space<vmem>>, vector<1x8x128xf32>
    %65 = vector.shape_cast %64 : vector<1x8x128xf32> to vector<8x128xf32>
    %cst_32 = arith.constant dense<0.000000e+00> : vector<8x128xf32>
    %66 = tpu.matmul %62, %18, %cst_32 {dimension_numbers = #tpu.dot_dimension_numbers<[1], [0], [0], [1], [0, 0, 1, 1], [], []>} : vector<8x32xf32>, vector<32x128xf32>, vector<8x128xf32> -> vector<8x128xf32>
    %67 = arith.addf %65, %66 : vector<8x128xf32>
    %68 = vector.extract_strided_slice %67 {offsets = [0, 0], sizes = [8, 96], strides = [1, 1]} : vector<8x128xf32> to vector<8x96xf32>
    %69 = arith.negf %68 : vector<8x96xf32>
    %70 = math.exp %69 : vector<8x96xf32>
    %cst_33 = arith.constant 1.000000e+00 : f32
    %71 = vector.broadcast %cst_33 : f32 to vector<8x96xf32>
    %72 = arith.addf %71, %70 : vector<8x96xf32>
    %73 = arith.divf %71, %72 : vector<8x96xf32>
    %74 = vector.extract_strided_slice %67 {offsets = [0, 96], sizes = [8, 32], strides = [1, 1]} : vector<8x128xf32> to vector<8x32xf32>
    %75 = math.tanh %74 : vector<8x32xf32>
    %76 = vector.extract_strided_slice %73 {offsets = [0, 0], sizes = [8, 32], strides = [1, 1]} : vector<8x96xf32> to vector<8x32xf32>
    %77 = vector.extract_strided_slice %73 {offsets = [0, 32], sizes = [8, 32], strides = [1, 1]} : vector<8x96xf32> to vector<8x32xf32>
    %78 = vector.extract_strided_slice %73 {offsets = [0, 64], sizes = [8, 32], strides = [1, 1]} : vector<8x96xf32> to vector<8x32xf32>
    %79 = arith.mulf %77, %60 : vector<8x32xf32>
    %80 = arith.mulf %76, %75 : vector<8x32xf32>
    %81 = arith.addf %79, %80 : vector<8x32xf32>
    %82 = math.tanh %81 : vector<8x32xf32>
    %83 = arith.mulf %78, %82 : vector<8x32xf32>
    %c3_i32 = arith.constant 3 : i32
    %84 = arith.index_cast %c3_i32 : i32 to index
    %c0_34 = arith.constant 0 : index
    %c0_35 = arith.constant 0 : index
    %85 = vector.load %arg11[%84, %c0_34, %c0_35] : memref<8x8x128xf32, #tpu.memory_space<vmem>>, vector<1x8x128xf32>
    %86 = vector.shape_cast %85 : vector<1x8x128xf32> to vector<8x128xf32>
    %cst_36 = arith.constant dense<0.000000e+00> : vector<8x128xf32>
    %87 = tpu.matmul %83, %18, %cst_36 {dimension_numbers = #tpu.dot_dimension_numbers<[1], [0], [0], [1], [0, 0, 1, 1], [], []>} : vector<8x32xf32>, vector<32x128xf32>, vector<8x128xf32> -> vector<8x128xf32>
    %88 = arith.addf %86, %87 : vector<8x128xf32>
    %89 = vector.extract_strided_slice %88 {offsets = [0, 0], sizes = [8, 96], strides = [1, 1]} : vector<8x128xf32> to vector<8x96xf32>
    %90 = arith.negf %89 : vector<8x96xf32>
    %91 = math.exp %90 : vector<8x96xf32>
    %cst_37 = arith.constant 1.000000e+00 : f32
    %92 = vector.broadcast %cst_37 : f32 to vector<8x96xf32>
    %93 = arith.addf %92, %91 : vector<8x96xf32>
    %94 = arith.divf %92, %93 : vector<8x96xf32>
    %95 = vector.extract_strided_slice %88 {offsets = [0, 96], sizes = [8, 32], strides = [1, 1]} : vector<8x128xf32> to vector<8x32xf32>
    %96 = math.tanh %95 : vector<8x32xf32>
    %97 = vector.extract_strided_slice %94 {offsets = [0, 0], sizes = [8, 32], strides = [1, 1]} : vector<8x96xf32> to vector<8x32xf32>
    %98 = vector.extract_strided_slice %94 {offsets = [0, 32], sizes = [8, 32], strides = [1, 1]} : vector<8x96xf32> to vector<8x32xf32>
    %99 = vector.extract_strided_slice %94 {offsets = [0, 64], sizes = [8, 32], strides = [1, 1]} : vector<8x96xf32> to vector<8x32xf32>
    %100 = arith.mulf %98, %81 : vector<8x32xf32>
    %101 = arith.mulf %97, %96 : vector<8x32xf32>
    %102 = arith.addf %100, %101 : vector<8x32xf32>
    %103 = math.tanh %102 : vector<8x32xf32>
    %104 = arith.mulf %99, %103 : vector<8x32xf32>
    %c4_i32 = arith.constant 4 : i32
    %105 = arith.index_cast %c4_i32 : i32 to index
    %c0_38 = arith.constant 0 : index
    %c0_39 = arith.constant 0 : index
    %106 = vector.load %arg11[%105, %c0_38, %c0_39] : memref<8x8x128xf32, #tpu.memory_space<vmem>>, vector<1x8x128xf32>
    %107 = vector.shape_cast %106 : vector<1x8x128xf32> to vector<8x128xf32>
    %cst_40 = arith.constant dense<0.000000e+00> : vector<8x128xf32>
    %108 = tpu.matmul %104, %18, %cst_40 {dimension_numbers = #tpu.dot_dimension_numbers<[1], [0], [0], [1], [0, 0, 1, 1], [], []>} : vector<8x32xf32>, vector<32x128xf32>, vector<8x128xf32> -> vector<8x128xf32>
    %109 = arith.addf %107, %108 : vector<8x128xf32>
    %110 = vector.extract_strided_slice %109 {offsets = [0, 0], sizes = [8, 96], strides = [1, 1]} : vector<8x128xf32> to vector<8x96xf32>
    %111 = arith.negf %110 : vector<8x96xf32>
    %112 = math.exp %111 : vector<8x96xf32>
    %cst_41 = arith.constant 1.000000e+00 : f32
    %113 = vector.broadcast %cst_41 : f32 to vector<8x96xf32>
    %114 = arith.addf %113, %112 : vector<8x96xf32>
    %115 = arith.divf %113, %114 : vector<8x96xf32>
    %116 = vector.extract_strided_slice %109 {offsets = [0, 96], sizes = [8, 32], strides = [1, 1]} : vector<8x128xf32> to vector<8x32xf32>
    %117 = math.tanh %116 : vector<8x32xf32>
    %118 = vector.extract_strided_slice %115 {offsets = [0, 0], sizes = [8, 32], strides = [1, 1]} : vector<8x96xf32> to vector<8x32xf32>
    %119 = vector.extract_strided_slice %115 {offsets = [0, 32], sizes = [8, 32], strides = [1, 1]} : vector<8x96xf32> to vector<8x32xf32>
    %120 = vector.extract_strided_slice %115 {offsets = [0, 64], sizes = [8, 32], strides = [1, 1]} : vector<8x96xf32> to vector<8x32xf32>
    %121 = arith.mulf %119, %102 : vector<8x32xf32>
    %122 = arith.mulf %118, %117 : vector<8x32xf32>
    %123 = arith.addf %121, %122 : vector<8x32xf32>
    %124 = math.tanh %123 : vector<8x32xf32>
    %125 = arith.mulf %120, %124 : vector<8x32xf32>
    %c5_i32 = arith.constant 5 : i32
    %126 = arith.index_cast %c5_i32 : i32 to index
    %c0_42 = arith.constant 0 : index
    %c0_43 = arith.constant 0 : index
    %127 = vector.load %arg11[%126, %c0_42, %c0_43] : memref<8x8x128xf32, #tpu.memory_space<vmem>>, vector<1x8x128xf32>
    %128 = vector.shape_cast %127 : vector<1x8x128xf32> to vector<8x128xf32>
    %cst_44 = arith.constant dense<0.000000e+00> : vector<8x128xf32>
    %129 = tpu.matmul %125, %18, %cst_44 {dimension_numbers = #tpu.dot_dimension_numbers<[1], [0], [0], [1], [0, 0, 1, 1], [], []>} : vector<8x32xf32>, vector<32x128xf32>, vector<8x128xf32> -> vector<8x128xf32>
    %130 = arith.addf %128, %129 : vector<8x128xf32>
    %131 = vector.extract_strided_slice %130 {offsets = [0, 0], sizes = [8, 96], strides = [1, 1]} : vector<8x128xf32> to vector<8x96xf32>
    %132 = arith.negf %131 : vector<8x96xf32>
    %133 = math.exp %132 : vector<8x96xf32>
    %cst_45 = arith.constant 1.000000e+00 : f32
    %134 = vector.broadcast %cst_45 : f32 to vector<8x96xf32>
    %135 = arith.addf %134, %133 : vector<8x96xf32>
    %136 = arith.divf %134, %135 : vector<8x96xf32>
    %137 = vector.extract_strided_slice %130 {offsets = [0, 96], sizes = [8, 32], strides = [1, 1]} : vector<8x128xf32> to vector<8x32xf32>
    %138 = math.tanh %137 : vector<8x32xf32>
    %139 = vector.extract_strided_slice %136 {offsets = [0, 0], sizes = [8, 32], strides = [1, 1]} : vector<8x96xf32> to vector<8x32xf32>
    %140 = vector.extract_strided_slice %136 {offsets = [0, 32], sizes = [8, 32], strides = [1, 1]} : vector<8x96xf32> to vector<8x32xf32>
    %141 = vector.extract_strided_slice %136 {offsets = [0, 64], sizes = [8, 32], strides = [1, 1]} : vector<8x96xf32> to vector<8x32xf32>
    %142 = arith.mulf %140, %123 : vector<8x32xf32>
    %143 = arith.mulf %139, %138 : vector<8x32xf32>
    %144 = arith.addf %142, %143 : vector<8x32xf32>
    %145 = math.tanh %144 : vector<8x32xf32>
    %146 = arith.mulf %141, %145 : vector<8x32xf32>
    %c6_i32 = arith.constant 6 : i32
    %147 = arith.index_cast %c6_i32 : i32 to index
    %c0_46 = arith.constant 0 : index
    %c0_47 = arith.constant 0 : index
    %148 = vector.load %arg11[%147, %c0_46, %c0_47] : memref<8x8x128xf32, #tpu.memory_space<vmem>>, vector<1x8x128xf32>
    %149 = vector.shape_cast %148 : vector<1x8x128xf32> to vector<8x128xf32>
    %cst_48 = arith.constant dense<0.000000e+00> : vector<8x128xf32>
    %150 = tpu.matmul %146, %18, %cst_48 {dimension_numbers = #tpu.dot_dimension_numbers<[1], [0], [0], [1], [0, 0, 1, 1], [], []>} : vector<8x32xf32>, vector<32x128xf32>, vector<8x128xf32> -> vector<8x128xf32>
    %151 = arith.addf %149, %150 : vector<8x128xf32>
    %152 = vector.extract_strided_slice %151 {offsets = [0, 0], sizes = [8, 96], strides = [1, 1]} : vector<8x128xf32> to vector<8x96xf32>
    %153 = arith.negf %152 : vector<8x96xf32>
    %154 = math.exp %153 : vector<8x96xf32>
    %cst_49 = arith.constant 1.000000e+00 : f32
    %155 = vector.broadcast %cst_49 : f32 to vector<8x96xf32>
    %156 = arith.addf %155, %154 : vector<8x96xf32>
    %157 = arith.divf %155, %156 : vector<8x96xf32>
    %158 = vector.extract_strided_slice %151 {offsets = [0, 96], sizes = [8, 32], strides = [1, 1]} : vector<8x128xf32> to vector<8x32xf32>
    %159 = math.tanh %158 : vector<8x32xf32>
    %160 = vector.extract_strided_slice %157 {offsets = [0, 0], sizes = [8, 32], strides = [1, 1]} : vector<8x96xf32> to vector<8x32xf32>
    %161 = vector.extract_strided_slice %157 {offsets = [0, 32], sizes = [8, 32], strides = [1, 1]} : vector<8x96xf32> to vector<8x32xf32>
    %162 = vector.extract_strided_slice %157 {offsets = [0, 64], sizes = [8, 32], strides = [1, 1]} : vector<8x96xf32> to vector<8x32xf32>
    %163 = arith.mulf %161, %144 : vector<8x32xf32>
    %164 = arith.mulf %160, %159 : vector<8x32xf32>
    %165 = arith.addf %163, %164 : vector<8x32xf32>
    %166 = math.tanh %165 : vector<8x32xf32>
    %167 = arith.mulf %162, %166 : vector<8x32xf32>
    %c7_i32 = arith.constant 7 : i32
    %168 = arith.index_cast %c7_i32 : i32 to index
    %c0_50 = arith.constant 0 : index
    %c0_51 = arith.constant 0 : index
    %169 = vector.load %arg11[%168, %c0_50, %c0_51] : memref<8x8x128xf32, #tpu.memory_space<vmem>>, vector<1x8x128xf32>
    %170 = vector.shape_cast %169 : vector<1x8x128xf32> to vector<8x128xf32>
    %cst_52 = arith.constant dense<0.000000e+00> : vector<8x128xf32>
    %171 = tpu.matmul %167, %18, %cst_52 {dimension_numbers = #tpu.dot_dimension_numbers<[1], [0], [0], [1], [0, 0, 1, 1], [], []>} : vector<8x32xf32>, vector<32x128xf32>, vector<8x128xf32> -> vector<8x128xf32>
    %172 = arith.addf %170, %171 : vector<8x128xf32>
    %173 = vector.extract_strided_slice %172 {offsets = [0, 0], sizes = [8, 96], strides = [1, 1]} : vector<8x128xf32> to vector<8x96xf32>
    %174 = arith.negf %173 : vector<8x96xf32>
    %175 = math.exp %174 : vector<8x96xf32>
    %cst_53 = arith.constant 1.000000e+00 : f32
    %176 = vector.broadcast %cst_53 : f32 to vector<8x96xf32>
    %177 = arith.addf %176, %175 : vector<8x96xf32>
    %178 = arith.divf %176, %177 : vector<8x96xf32>
    %179 = vector.extract_strided_slice %172 {offsets = [0, 96], sizes = [8, 32], strides = [1, 1]} : vector<8x128xf32> to vector<8x32xf32>
    %180 = math.tanh %179 : vector<8x32xf32>
    %181 = vector.extract_strided_slice %178 {offsets = [0, 0], sizes = [8, 32], strides = [1, 1]} : vector<8x96xf32> to vector<8x32xf32>
    %182 = vector.extract_strided_slice %178 {offsets = [0, 32], sizes = [8, 32], strides = [1, 1]} : vector<8x96xf32> to vector<8x32xf32>
    %183 = vector.extract_strided_slice %178 {offsets = [0, 64], sizes = [8, 32], strides = [1, 1]} : vector<8x96xf32> to vector<8x32xf32>
    %184 = arith.mulf %182, %165 : vector<8x32xf32>
    %185 = arith.mulf %181, %180 : vector<8x32xf32>
    %186 = arith.addf %184, %185 : vector<8x32xf32>
    %187 = math.tanh %186 : vector<8x32xf32>
    %188 = arith.mulf %183, %187 : vector<8x32xf32>
    %c8_i32 = arith.constant 8 : i32
    %c0_54 = arith.constant 0 : index
    %c0_55 = arith.constant 0 : index
    %189 = vector.load %arg12[%c0_54, %c0_55] : memref<8x32xf32, #tpu.memory_space<vmem>>, vector<8x32xf32>
    tpu.vector_store %arg12[%c0_54, %c0_55], %188 {strides = array<i32>} : memref<8x32xf32, #tpu.memory_space<vmem>>, vector<8x32xf32>,
    %c0_56 = arith.constant 0 : index
    %c0_57 = arith.constant 0 : index
    %190 = vector.load %arg13[%c0_56, %c0_57] : memref<8x32xf32, #tpu.memory_space<vmem>>, vector<8x32xf32>
    tpu.vector_store %arg13[%c0_56, %c0_57], %186 {strides = array<i32>} : memref<8x32xf32, #tpu.memory_space<vmem>>, vector<8x32xf32>,
    %c0_i32_58 = arith.constant 0 : i32
    %191 = arith.cmpi eq, %arg1, %c0_i32_58 : i32
    %192 = arith.extui %191 : i1 to i32
    %c0_i32_59 = arith.constant 0 : i32
    %193 = arith.cmpi ne, %192, %c0_i32_59 : i32
    scf.if %193 {
      %c0_60 = arith.constant 0 : index
      %c0_61 = arith.constant 0 : index
      %194 = vector.load %arg8[%c0_60, %c0_61] : memref<1x32xf32, #tpu.memory_space<vmem>>, vector<1x32xf32>
      %195 = vector.broadcast %194 : vector<1x32xf32> to vector<8x32xf32>
      %196 = arith.mulf %188, %195 : vector<8x32xf32>
      %cst_62 = arith.constant dense<0.000000e+00> : vector<8xf32>
      %197 = vector.multi_reduction <add>, %196, %cst_62 [1] : vector<8x32xf32> to vector<8xf32>
      %198 = vector.shape_cast %197 : vector<8xf32> to vector<8x1xf32>
      %c0_63 = arith.constant 0 : index
      %c0_64 = arith.constant 0 : index
      %199 = vector.load %arg9[%c0_63, %c0_64] : memref<1x1xf32, #tpu.memory_space<vmem>>, vector<1x1xf32>
      %200 = vector.broadcast %199 : vector<1x1xf32> to vector<8x1xf32>
      %201 = arith.addf %198, %200 : vector<8x1xf32>
      %c0_65 = arith.constant 0 : index
      %c0_66 = arith.constant 0 : index
      %202 = vector.load %arg10[%c0_65, %c0_66] : memref<8x1xf32, #tpu.memory_space<vmem>>, vector<8x1xf32>
      tpu.vector_store %arg10[%c0_65, %c0_66], %201 {strides = array<i32>} : memref<8x1xf32, #tpu.memory_space<vmem>>, vector<8x1xf32>,
    } else {
    }
    return
  }
  func.func @transform_0(%arg0: i32, %arg1: i32) -> (i32, i32, i32) {
    %c0_i32 = arith.constant 0 : i32
    %c0_i32_0 = arith.constant 0 : i32
    return %arg1, %arg0, %c0_i32 : i32, i32, i32
  }
  func.func @transform_1(%arg0: i32, %arg1: i32) -> (i32, i32) {
    %c0_i32 = arith.constant 0 : i32
    %c0_i32_0 = arith.constant 0 : i32
    return %arg0, %c0_i32 : i32, i32
  }
  func.func @transform_2(%arg0: i32, %arg1: i32) -> (i32, i32) {
    %c0_i32 = arith.constant 0 : i32
    %c0_i32_0 = arith.constant 0 : i32
    %c0_i32_1 = arith.constant 0 : i32
    return %c0_i32, %c0_i32_0 : i32, i32
  }
  func.func @transform_3(%arg0: i32, %arg1: i32) -> (i32, i32) {
    %c0_i32 = arith.constant 0 : i32
    %c0_i32_0 = arith.constant 0 : i32
    %c0_i32_1 = arith.constant 0 : i32
    return %c0_i32, %c0_i32_0 : i32, i32
  }
  func.func @transform_4(%arg0: i32, %arg1: i32) -> (i32, i32) {
    %c0_i32 = arith.constant 0 : i32
    %c0_i32_0 = arith.constant 0 : i32
    %c0_i32_1 = arith.constant 0 : i32
    return %c0_i32, %c0_i32_0 : i32, i32
  }
  func.func @transform_5(%arg0: i32, %arg1: i32) -> (i32, i32) {
    %c0_i32 = arith.constant 0 : i32
    %c0_i32_0 = arith.constant 0 : i32
    %c0_i32_1 = arith.constant 0 : i32
    return %c0_i32, %c0_i32_0 : i32, i32
  }
  func.func @transform_6(%arg0: i32, %arg1: i32) -> (i32, i32) {
    %c0_i32 = arith.constant 0 : i32
    %c0_i32_0 = arith.constant 0 : i32
    %c0_i32_1 = arith.constant 0 : i32
    return %c0_i32, %c0_i32_0 : i32, i32
  }
  func.func @transform_7(%arg0: i32, %arg1: i32) -> (i32, i32) {
    %c0_i32 = arith.constant 0 : i32
    %c0_i32_0 = arith.constant 0 : i32
    %c0_i32_1 = arith.constant 0 : i32
    return %c0_i32, %c0_i32_0 : i32, i32
  }
  func.func @transform_8(%arg0: i32, %arg1: i32) -> (i32, i32) {
    %c0_i32 = arith.constant 0 : i32
    %c0_i32_0 = arith.constant 0 : i32
    return %arg0, %c0_i32 : i32, i32
  }
}

</mosaic_0001>

<llo_original>
// kernel: tpu_custom_call.1
$region0: #{tpu_custom_call.1}
  #allocation0 [shape = 'u32[]', space=smem, size = 0x4, offset = 0x4, fixed_abs, tag = 'smem constant byte address 0x4 - core index']
  #allocation1 [shape = 'u32[144,128]{1,0:T(1,128)}', space=vmem, size = 0x12000, scoped, tag = 'internal scratch']
  #allocation2 [shape = 'f32[8,8,128]{2,1,0:T(8,128)}', space=vmem, size = 0x8000, scoped, tag = 'scratch operand']
  #allocation3 [shape = 'f32[8,32]{1,0:T(8,128)}', space=vmem, size = 0x1000, scoped, tag = 'scratch operand']
  #allocation4 [shape = 'f32[8,32]{1,0:T(8,128)}', space=vmem, size = 0x1000, scoped, tag = 'scratch operand']
  #allocation5 [shape = 'f32[1,1]{1,0:T(1,128)S(1)}', space=vmem, size = 0x200, scoped, tag = 'scoped memory for tpu_custom_call.1']
  %s0 = inlined_call_operand.vmem [shape: f32[8,8,4], index: 0, kind: input, shape index: {}]
  %s1 = inlined_call_operand.vmem [shape: f32[8,4], index: 1, kind: input, shape index: {}]
  %s2 = inlined_call_operand.vmem [shape: f32[4,128], index: 2, kind: input, shape index: {}]
  %s3 = inlined_call_operand.vmem [shape: f32[4,128], index: 3, kind: input, shape index: {}]
  %s4 = inlined_call_operand.vmem [shape: f32[1,128], index: 4, kind: input, shape index: {}]
  %s5 = inlined_call_operand.vmem [shape: f32[32,128], index: 5, kind: input, shape index: {}]
  %s6 = inlined_call_operand.vmem [shape: f32[1,32], index: 6, kind: input, shape index: {}]
  %s7 = inlined_call_operand.<no memory space> [shape: f32[1,1], index: 7, kind: input, shape index: {}]
  %s8 = inlined_call_operand.vmem [shape: f32[8,1], index: 8, kind: output, shape index: {}]
  %s9 = sld [smem:[#allocation0]]
  $region50: #{tpu_custom_call.1} parent=0
    _
  %s11 = ssub.s32 1, %s9
  %s12 = scalar_select 0, %s11, %s9
  %v13 = vstv %s7
  %14 = vst [vmem:[#allocation5] sm:$0x1] %v13
  // Predicated region
  $region2: #{tpu_custom_call.1} parent=0 // pred_check
    _
  $region3: #{tpu_custom_call.1} parent=0 // pred_check_branch
    %16 = sbr.rel (0) target = $region5
  $region4: #{tpu_custom_call.1} parent=0 // pred_region
    _
  $region5: #{tpu_custom_call.1} parent=0 // pred_fallthru
    _
  // Predicated region
  $region6: #{tpu_custom_call.1} parent=0 // pred_check
    _
  $region7: #{tpu_custom_call.1} parent=0 // pred_check_branch
    %18 = sbr.rel (0) target = $region9
  $region8: #{tpu_custom_call.1} parent=0 // pred_region
    _
  $region9: #{tpu_custom_call.1} parent=0 // pred_fallthru
    _
  // Predicated region
  $region10: #{tpu_custom_call.1} parent=0 // pred_check
    _
  $region11: #{tpu_custom_call.1} parent=0 // pred_check_branch
    %20 = sbr.rel (0) target = $region13
  $region12: #{tpu_custom_call.1} parent=0 // pred_region
    _
  $region13: #{tpu_custom_call.1} parent=0 // pred_fallthru
    _
  // Predicated region
  $region14: #{tpu_custom_call.1} parent=0 // pred_check
    _
  $region15: #{tpu_custom_call.1} parent=0 // pred_check_branch
    %22 = sbr.rel (0) target = $region17
  $region16: #{tpu_custom_call.1} parent=0 // pred_region
    _
  $region17: #{tpu_custom_call.1} parent=0 // pred_fallthru
    _
  // Predicated region
  $region18: #{tpu_custom_call.1} parent=0 // pred_check
    _
  $region19: #{tpu_custom_call.1} parent=0 // pred_check_branch
    %24 = sbr.rel (0) target = $region21
  $region20: #{tpu_custom_call.1} parent=0 // pred_region
    _
  $region21: #{tpu_custom_call.1} parent=0 // pred_fallthru
    _
  // Predicated region
  $region22: #{tpu_custom_call.1} parent=0 // pred_check
    _
  $region23: #{tpu_custom_call.1} parent=0 // pred_check_branch
    %26 = sbr.rel (0) target = $region25
  $region24: #{tpu_custom_call.1} parent=0 // pred_region
    _
  $region25: #{tpu_custom_call.1} parent=0 // pred_fallthru
    _
  // Predicated region
  $region26: #{tpu_custom_call.1} parent=0 // pred_check
    _
  $region27: #{tpu_custom_call.1} parent=0 // pred_check_branch
    %28 = sbr.rel (0) target = $region29
  $region28: #{tpu_custom_call.1} parent=0 // pred_region
    _
  $region29: #{tpu_custom_call.1} parent=0 // pred_fallthru
    _
  // Predicated region
  $region30: #{tpu_custom_call.1} parent=0 // pred_check
    _
  $region31: #{tpu_custom_call.1} parent=0 // pred_check_branch
    %30 = sbr.rel (0) target = $region33
  $region32: #{tpu_custom_call.1} parent=0 // pred_region
    _
  $region33: #{tpu_custom_call.1} parent=0 // pred_fallthru
    _
  %p31 = scmp.eq.s32.totalorder 0, 0
  // Predicated region
  $region34: #{tpu_custom_call.1} parent=0 // pred_check
    %p32 = pneg %p31
  $region35: #{tpu_custom_call.1} parent=0 // pred_check_branch
    %34 = sbr.rel (%p32) target = $region37
  $region36: #{tpu_custom_call.1} parent=0 // pred_region
    %vm35 = vcmask 261120
    %36 = vst.msk [vmem:[#allocation3] sm:$0xff] %vm35, 0.0
    %37 = vst.msk [vmem:[#allocation4] sm:$0xff] %vm35, 0.0
  $region37: #{tpu_custom_call.1} parent=0 // pred_fallthru
    _
  %v38 = vld [vmem:[%s1] sm:$0xff]
  %v39 = vld [vmem:[%s3] sm:$0xf]
  %v40 = vld [vmem:[%s4] sm:$0x1]
  %v42 = vlaneseq
  %v43 = vshrl.u32 %v42, 7
  %v44 = vsub.s32 0, %v43
  %v45 = vrot.slane %v40, %v44
  %vm47 = vcmask 31744
  %v49 = vsel %vm47, %v38, 0
  %vm51 = vcmask 1043456
  %v53 = vsel %vm51, %v39, 0
  %55 = vmatprep.subr.mxu0 0.0
  %56 = vmatpush1.msra.mxu0 0.0
  %57 = vmatprep.subr.mxu0 0.0
  %58 = vmatpush1.msra.mxu0 0.0
  %59 = vmatprep.subr.mxu0 0.0
  %60 = vmatpush1.msra.mxu0 0.0
  %61 = vmatprep.subr.mxu0 0.0
  %62 = vmatpush1.msra.mxu0 0.0
  %63 = vmatprep.subr.mxu0 0.0
  %64 = vmatpush1.msra.mxu0 0.0
  %65 = vmatprep.subr.mxu0 0.0
  %66 = vmatpush1.msra.mxu0 0.0
  %67 = vmatprep.subr.mxu0 0.0
  %68 = vmatpush1.msra.mxu0 0.0
  %69 = vmatprep.subr.mxu0 0.0
  %70 = vmatpush1.msra.mxu0 0.0
  %71 = vmatprep.subr.mxu0 0.0
  %72 = vmatpush1.msra.mxu0 0.0
  %73 = vmatprep.subr.mxu0 0.0
  %74 = vmatpush1.msra.mxu0 0.0
  %75 = vmatprep.subr.mxu0 0.0
  %76 = vmatpush1.msra.mxu0 0.0
  %77 = vmatprep.subr.mxu0 0.0
  %78 = vmatpush1.msra.mxu0 0.0
  %79 = vmatprep.subr.mxu0 0.0
  %80 = vmatpush1.msra.mxu0 0.0
  %81 = vmatprep.subr.mxu0 0.0
  %82 = vmatpush1.msra.mxu0 0.0
  %83 = vmatprep.subr.mxu0 0.0
  %84 = vmatpush1.msra.mxu0 0.0
  %85 = vmatprep.subr.mxu0 0.0
  %86 = vmatpush1.msra.mxu0 %v53
  %87 = vmatprep.subr.mxu0 0.0
  %88 = vmatpush2.msra.mxu0 0.0
  %89 = vmatprep.subr.mxu0 0.0
  %90 = vmatpush2.msra.mxu0 0.0
  %91 = vmatprep.subr.mxu0 0.0
  %92 = vmatpush2.msra.mxu0 0.0
  %93 = vmatprep.subr.mxu0 0.0
  %94 = vmatpush2.msra.mxu0 0.0
  %95 = vmatprep.subr.mxu0 0.0
  %96 = vmatpush2.msra.mxu0 0.0
  %97 = vmatprep.subr.mxu0 0.0
  %98 = vmatpush2.msra.mxu0 0.0
  %99 = vmatprep.subr.mxu0 0.0
  %100 = vmatpush2.msra.mxu0 0.0
  %101 = vmatprep.subr.mxu0 0.0
  %102 = vmatpush2.msra.mxu0 0.0
  %103 = vmatprep.subr.mxu0 0.0
  %104 = vmatpush2.msra.mxu0 0.0
  %105 = vmatprep.subr.mxu0 0.0
  %106 = vmatpush2.msra.mxu0 0.0
  %107 = vmatprep.subr.mxu0 0.0
  %108 = vmatpush2.msra.mxu0 0.0
  %109 = vmatprep.subr.mxu0 0.0
  %110 = vmatpush2.msra.mxu0 0.0
  %111 = vmatprep.subr.mxu0 0.0
  %112 = vmatpush2.msra.mxu0 0.0
  %113 = vmatprep.subr.mxu0 0.0
  %114 = vmatpush2.msra.mxu0 0.0
  %115 = vmatprep.subr.mxu0 0.0
  %116 = vmatpush2.msra.mxu0 0.0
  %117 = vmatprep.subr.mxu0 0.0
  %118 = vmatpush2.msra.mxu0 0.0
  %119 = vmatprep.mubr.f32.mxu0 0.0
  %120 = vmatmul.mubr.f32.gmra.mxu0 %v49
  %v121 = vpop.f32.mrf.mxu0
  %v122 = vadd.f32 %v45, %v121
  %v123 = vpop.f32.mrf.mxu0
  %124 = vdwg.mxu0
  %v125 = vld [vmem:[%s0] sm:$0xff]
  %v126 = vld [vmem:[%s0 + $0x8] sm:$0xff]
  %v127 = vld [vmem:[%s0 + $0x10] sm:$0xff]
  %v128 = vld [vmem:[%s0 + $0x18] sm:$0xff]
  %v129 = vld [vmem:[%s0 + $0x20] sm:$0xff]
  %v130 = vld [vmem:[%s0 + $0x28] sm:$0xff]
  %v131 = vld [vmem:[%s0 + $0x30] sm:$0xff]
  %v132 = vld [vmem:[%s0 + $0x38] sm:$0xff]
  %v133 = vld [vmem:[%s2] sm:$0xf]
  %v135 = vsel %vm47, %v125, 0
  %v138 = vsel %vm47, %v126, 0
  %v141 = vsel %vm47, %v127, 0
  %v144 = vsel %vm47, %v128, 0
  %v147 = vsel %vm47, %v129, 0
  %v150 = vsel %vm47, %v130, 0
  %v153 = vsel %vm47, %v131, 0
  %v156 = vsel %vm47, %v132, 0
  %v159 = vsel %vm51, %v133, 0
  %161 = vmatprep.subr.mxu0 0.0
  %162 = vmatpush1.msra.mxu0 0.0
  %163 = vmatprep.subr.mxu0 0.0
  %164 = vmatpush1.msra.mxu0 0.0
  %165 = vmatprep.subr.mxu0 0.0
  %166 = vmatpush1.msra.mxu0 0.0
  %167 = vmatprep.subr.mxu0 0.0
  %168 = vmatpush1.msra.mxu0 0.0
  %169 = vmatprep.subr.mxu0 0.0
  %170 = vmatpush1.msra.mxu0 0.0
  %171 = vmatprep.subr.mxu0 0.0
  %172 = vmatpush1.msra.mxu0 0.0
  %173 = vmatprep.subr.mxu0 0.0
  %174 = vmatpush1.msra.mxu0 0.0
  %175 = vmatprep.subr.mxu0 0.0
  %176 = vmatpush1.msra.mxu0 0.0
  %177 = vmatprep.subr.mxu0 0.0
  %178 = vmatpush1.msra.mxu0 0.0
  %179 = vmatprep.subr.mxu0 0.0
  %180 = vmatpush1.msra.mxu0 0.0
  %181 = vmatprep.subr.mxu0 0.0
  %182 = vmatpush1.msra.mxu0 0.0
  %183 = vmatprep.subr.mxu0 0.0
  %184 = vmatpush1.msra.mxu0 0.0
  %185 = vmatprep.subr.mxu0 0.0
  %186 = vmatpush1.msra.mxu0 0.0
  %187 = vmatprep.subr.mxu0 0.0
  %188 = vmatpush1.msra.mxu0 0.0
  %189 = vmatprep.subr.mxu0 0.0
  %190 = vmatpush1.msra.mxu0 0.0
  %191 = vmatprep.subr.mxu0 0.0
  %192 = vmatpush1.msra.mxu0 %v159
  %193 = vmatprep.subr.mxu0 0.0
  %194 = vmatpush2.msra.mxu0 0.0
  %195 = vmatprep.subr.mxu0 0.0
  %196 = vmatpush2.msra.mxu0 0.0
  %197 = vmatprep.subr.mxu0 0.0
  %198 = vmatpush2.msra.mxu0 0.0
  %199 = vmatprep.subr.mxu0 0.0
  %200 = vmatpush2.msra.mxu0 0.0
  %201 = vmatprep.subr.mxu0 0.0
  %202 = vmatpush2.msra.mxu0 0.0
  %203 = vmatprep.subr.mxu0 0.0
  %204 = vmatpush2.msra.mxu0 0.0
  %205 = vmatprep.subr.mxu0 0.0
  %206 = vmatpush2.msra.mxu0 0.0
  %207 = vmatprep.subr.mxu0 0.0
  %208 = vmatpush2.msra.mxu0 0.0
  %209 = vmatprep.subr.mxu0 0.0
  %210 = vmatpush2.msra.mxu0 0.0
  %211 = vmatprep.subr.mxu0 0.0
  %212 = vmatpush2.msra.mxu0 0.0
  %213 = vmatprep.subr.mxu0 0.0
  %214 = vmatpush2.msra.mxu0 0.0
  %215 = vmatprep.subr.mxu0 0.0
  %216 = vmatpush2.msra.mxu0 0.0
  %217 = vmatprep.subr.mxu0 0.0
  %218 = vmatpush2.msra.mxu0 0.0
  %219 = vmatprep.subr.mxu0 0.0
  %220 = vmatpush2.msra.mxu0 0.0
  %221 = vmatprep.subr.mxu0 0.0
  %222 = vmatpush2.msra.mxu0 0.0
  %223 = vmatprep.subr.mxu0 0.0
  %224 = vmatpush2.msra.mxu0 0.0
  %225 = vmatprep.mubr.f32.mxu0 0.0
  %226 = vmatmul.mubr.f32.gmra.mxu0 %v135
  %v227 = vpop.f32.mrf.mxu0
  %v228 = vadd.f32 0.0, %v227
  %v229 = vpop.f32.mrf.mxu0
  %230 = vmatprep.mubr.f32.mxu0 0.0
  %231 = vmatmul.mubr.f32.gmra.mxu0 %v138
  %v232 = vpop.f32.mrf.mxu0
  %v233 = vadd.f32 0.0, %v232
  %v234 = vpop.f32.mrf.mxu0
  %235 = vmatprep.mubr.f32.mxu0 0.0
  %236 = vmatmul.mubr.f32.gmra.mxu0 %v141
  %v237 = vpop.f32.mrf.mxu0
  %v238 = vadd.f32 0.0, %v237
  %v239 = vpop.f32.mrf.mxu0
  %240 = vmatprep.mubr.f32.mxu0 0.0
  %241 = vmatmul.mubr.f32.gmra.mxu0 %v144
  %v242 = vpop.f32.mrf.mxu0
  %v243 = vadd.f32 0.0, %v242
  %v244 = vpop.f32.mrf.mxu0
  %245 = vmatprep.mubr.f32.mxu0 0.0
  %246 = vmatmul.mubr.f32.gmra.mxu0 %v147
  %v247 = vpop.f32.mrf.mxu0
  %v248 = vadd.f32 0.0, %v247
  %v249 = vpop.f32.mrf.mxu0
  %250 = vmatprep.mubr.f32.mxu0 0.0
  %251 = vmatmul.mubr.f32.gmra.mxu0 %v150
  %v252 = vpop.f32.mrf.mxu0
  %v253 = vadd.f32 0.0, %v252
  %v254 = vpop.f32.mrf.mxu0
  %255 = vmatprep.mubr.f32.mxu0 0.0
  %256 = vmatmul.mubr.f32.gmra.mxu0 %v153
  %v257 = vpop.f32.mrf.mxu0
  %v258 = vadd.f32 0.0, %v257
  %v259 = vpop.f32.mrf.mxu0
  %260 = vmatprep.mubr.f32.mxu0 0.0
  %261 = vmatmul.mubr.f32.gmra.mxu0 %v156
  %v262 = vpop.f32.mrf.mxu0
  %v263 = vadd.f32 0.0, %v262
  %v264 = vpop.f32.mrf.mxu0
  %265 = vdwg.mxu0
  %v266 = vadd.f32 %v228, %v122
  %v267 = vadd.f32 %v233, %v122
  %v268 = vadd.f32 %v238, %v122
  %v269 = vadd.f32 %v243, %v122
  %v270 = vadd.f32 %v248, %v122
  %v271 = vadd.f32 %v253, %v122
  %v272 = vadd.f32 %v258, %v122
  %v273 = vadd.f32 %v263, %v122
  %274 = vst [vmem:[#allocation2] sm:$0xff] %v266
  %275 = vst [vmem:[#allocation2 + $0x8] sm:$0xff] %v267
  %276 = vst [vmem:[#allocation2 + $0x10] sm:$0xff] %v268
  %277 = vst [vmem:[#allocation2 + $0x18] sm:$0xff] %v269
  %278 = vst [vmem:[#allocation2 + $0x20] sm:$0xff] %v270
  %279 = vst [vmem:[#allocation2 + $0x28] sm:$0xff] %v271
  %280 = vst [vmem:[#allocation2 + $0x30] sm:$0xff] %v272
  %281 = vst [vmem:[#allocation2 + $0x38] sm:$0xff] %v273
  %v282 = vld [vmem:[%s5] sm:$0xff]
  %v283 = vld [vmem:[%s5 + $0x8] sm:$0xff]
  %v284 = vld [vmem:[%s5 + $0x10] sm:$0xff]
  %v285 = vld [vmem:[%s5 + $0x18] sm:$0xff]
  %v286 = vld [vmem:[#allocation3] sm:$0xff]
  %v287 = vld [vmem:[#allocation4] sm:$0xff]
  %v288 = vld [vmem:[#allocation2] sm:$0xff]
  %vm289 = vcmask 261120
  %v291 = vsel %vm289, %v286, 0
  %293 = vmatprep.subr.mxu0 0.0
  %294 = vmatpush1.msra.mxu0 0.0
  %295 = vmatprep.subr.mxu0 0.0
  %296 = vmatpush1.msra.mxu0 0.0
  %297 = vmatprep.subr.mxu0 0.0
  %298 = vmatpush1.msra.mxu0 0.0
  %299 = vmatprep.subr.mxu0 0.0
  %300 = vmatpush1.msra.mxu0 0.0
  %301 = vmatprep.subr.mxu0 0.0
  %302 = vmatpush1.msra.mxu0 0.0
  %303 = vmatprep.subr.mxu0 0.0
  %304 = vmatpush1.msra.mxu0 0.0
  %305 = vmatprep.subr.mxu0 0.0
  %306 = vmatpush1.msra.mxu0 0.0
  %307 = vmatprep.subr.mxu0 0.0
  %308 = vmatpush1.msra.mxu0 0.0
  %309 = vmatprep.subr.mxu0 0.0
  %310 = vmatpush1.msra.mxu0 0.0
  %311 = vmatprep.subr.mxu0 0.0
  %312 = vmatpush1.msra.mxu0 0.0
  %313 = vmatprep.subr.mxu0 0.0
  %314 = vmatpush1.msra.mxu0 0.0
  %315 = vmatprep.subr.mxu0 0.0
  %316 = vmatpush1.msra.mxu0 0.0
  %317 = vmatprep.subr.mxu0 0.0
  %318 = vmatpush1.msra.mxu0 %v285
  %319 = vmatprep.subr.mxu0 0.0
  %320 = vmatpush1.msra.mxu0 %v284
  %321 = vmatprep.subr.mxu0 0.0
  %322 = vmatpush1.msra.mxu0 %v283
  %323 = vmatprep.subr.mxu0 0.0
  %324 = vmatpush1.msra.mxu0 %v282
  %325 = vmatprep.subr.mxu0 0.0
  %326 = vmatpush2.msra.mxu0 0.0
  %327 = vmatprep.subr.mxu0 0.0
  %328 = vmatpush2.msra.mxu0 0.0
  %329 = vmatprep.subr.mxu0 0.0
  %330 = vmatpush2.msra.mxu0 0.0
  %331 = vmatprep.subr.mxu0 0.0
  %332 = vmatpush2.msra.mxu0 0.0
  %333 = vmatprep.subr.mxu0 0.0
  %334 = vmatpush2.msra.mxu0 0.0
  %335 = vmatprep.subr.mxu0 0.0
  %336 = vmatpush2.msra.mxu0 0.0
  %337 = vmatprep.subr.mxu0 0.0
  %338 = vmatpush2.msra.mxu0 0.0
  %339 = vmatprep.subr.mxu0 0.0
  %340 = vmatpush2.msra.mxu0 0.0
  %341 = vmatprep.subr.mxu0 0.0
  %342 = vmatpush2.msra.mxu0 0.0
  %343 = vmatprep.subr.mxu0 0.0
  %344 = vmatpush2.msra.mxu0 0.0
  %345 = vmatprep.subr.mxu0 0.0
  %346 = vmatpush2.msra.mxu0 0.0
  %347 = vmatprep.subr.mxu0 0.0
  %348 = vmatpush2.msra.mxu0 0.0
  %349 = vmatprep.subr.mxu0 0.0
  %350 = vmatpush2.msra.mxu0 0.0
  %351 = vmatprep.subr.mxu0 0.0
  %352 = vmatpush2.msra.mxu0 0.0
  %353 = vmatprep.subr.mxu0 0.0
  %354 = vmatpush2.msra.mxu0 0.0
  %355 = vmatprep.subr.mxu0 0.0
  %356 = vmatpush2.msra.mxu0 0.0
  %357 = vmatprep.mubr.f32.mxu0 0.0
  %358 = vmatmul.mubr.f32.gmra.mxu0 %v291
  %v359 = vpop.f32.mrf.mxu0
  %v360 = vadd.f32 0.0, %v359
  %v361 = vpop.f32.mrf.mxu0
  %362 = vdwg.mxu0
  %v363 = vadd.f32 %v288, %v360
  %v364 = vxor.u32 %v363, 2147483648
  %v365 = vmul.f32 %v364, 1.442695
  %v366 = vpow.pop %v365
  %v367 = vadd.f32 %v366, 1.0
  %v368 = vrcp.pop %v367
  %v369 = vmul.f32 1.0, %v368
  %v370 = vtanh.pop %v363
  %372 = vrot.lane.b32.xlu0 %v287, 32
  %v373 = vpop.permute.xlu0 %372
  %v375 = vmul.f32 %v369, %v373
  %377 = vrot.lane.b32.xlu0 %v370, 32
  %v378 = vpop.permute.xlu0 %377
  %v380 = vmul.f32 %v369, %v378
  %382 = vrot.lane.b32.xlu0 %v380, 32
  %v383 = vpop.permute.xlu0 %382
  %v385 = vadd.f32 %v375, %v383
  %v386 = vtanh.pop %v385
  %388 = vrot.lane.b32.xlu0 %v386, 32
  %v389 = vpop.permute.xlu0 %388
  %v391 = vmul.f32 %v369, %v389
  %s392 = scalar_lea.vmem [#allocation2], 8
  %v393 = vld [vmem:[%s392] sm:$0xff]
  %395 = vrot.lane.b32.xlu0 %v391, 64
  %v396 = vpop.permute.xlu0 %395
  %v397 = vsel %vm289, %v396, 0
  %399 = vmatprep.subr.mxu0 0.0
  %400 = vmatpush1.msra.mxu0 0.0
  %401 = vmatprep.subr.mxu0 0.0
  %402 = vmatpush1.msra.mxu0 0.0
  %403 = vmatprep.subr.mxu0 0.0
  %404 = vmatpush1.msra.mxu0 0.0
  %405 = vmatprep.subr.mxu0 0.0
  %406 = vmatpush1.msra.mxu0 0.0
  %407 = vmatprep.subr.mxu0 0.0
  %408 = vmatpush1.msra.mxu0 0.0
  %409 = vmatprep.subr.mxu0 0.0
  %410 = vmatpush1.msra.mxu0 0.0
  %411 = vmatprep.subr.mxu0 0.0
  %412 = vmatpush1.msra.mxu0 0.0
  %413 = vmatprep.subr.mxu0 0.0
  %414 = vmatpush1.msra.mxu0 0.0
  %415 = vmatprep.subr.mxu0 0.0
  %416 = vmatpush1.msra.mxu0 0.0
  %417 = vmatprep.subr.mxu0 0.0
  %418 = vmatpush1.msra.mxu0 0.0
  %419 = vmatprep.subr.mxu0 0.0
  %420 = vmatpush1.msra.mxu0 0.0
  %421 = vmatprep.subr.mxu0 0.0
  %422 = vmatpush1.msra.mxu0 0.0
  %423 = vmatprep.subr.mxu0 0.0
  %424 = vmatpush1.msra.mxu0 %v285
  %425 = vmatprep.subr.mxu0 0.0
  %426 = vmatpush1.msra.mxu0 %v284
  %427 = vmatprep.subr.mxu0 0.0
  %428 = vmatpush1.msra.mxu0 %v283
  %429 = vmatprep.subr.mxu0 0.0
  %430 = vmatpush1.msra.mxu0 %v282
  %431 = vmatprep.subr.mxu0 0.0
  %432 = vmatpush2.msra.mxu0 0.0
  %433 = vmatprep.subr.mxu0 0.0
  %434 = vmatpush2.msra.mxu0 0.0
  %435 = vmatprep.subr.mxu0 0.0
  %436 = vmatpush2.msra.mxu0 0.0
  %437 = vmatprep.subr.mxu0 0.0
  %438 = vmatpush2.msra.mxu0 0.0
  %439 = vmatprep.subr.mxu0 0.0
  %440 = vmatpush2.msra.mxu0 0.0
  %441 = vmatprep.subr.mxu0 0.0
  %442 = vmatpush2.msra.mxu0 0.0
  %443 = vmatprep.subr.mxu0 0.0
  %444 = vmatpush2.msra.mxu0 0.0
  %445 = vmatprep.subr.mxu0 0.0
  %446 = vmatpush2.msra.mxu0 0.0
  %447 = vmatprep.subr.mxu0 0.0
  %448 = vmatpush2.msra.mxu0 0.0
  %449 = vmatprep.subr.mxu0 0.0
  %450 = vmatpush2.msra.mxu0 0.0
  %451 = vmatprep.subr.mxu0 0.0
  %452 = vmatpush2.msra.mxu0 0.0
  %453 = vmatprep.subr.mxu0 0.0
  %454 = vmatpush2.msra.mxu0 0.0
  %455 = vmatprep.subr.mxu0 0.0
  %456 = vmatpush2.msra.mxu0 0.0
  %457 = vmatprep.subr.mxu0 0.0
  %458 = vmatpush2.msra.mxu0 0.0
  %459 = vmatprep.subr.mxu0 0.0
  %460 = vmatpush2.msra.mxu0 0.0
  %461 = vmatprep.subr.mxu0 0.0
  %462 = vmatpush2.msra.mxu0 0.0
  %463 = vmatprep.mubr.f32.mxu0 0.0
  %464 = vmatmul.mubr.f32.gmra.mxu0 %v397
  %v465 = vpop.f32.mrf.mxu0
  %v466 = vadd.f32 0.0, %v465
  %v467 = vpop.f32.mrf.mxu0
  %468 = vdwg.mxu0
  %v469 = vadd.f32 %v393, %v466
  %v470 = vxor.u32 %v469, 2147483648
  %v471 = vmul.f32 %v470, 1.442695
  %v472 = vpow.pop %v471
  %v473 = vadd.f32 %v472, 1.0
  %v474 = vrcp.pop %v473
  %v475 = vmul.f32 1.0, %v474
  %v476 = vtanh.pop %v469
  %v477 = vmul.f32 %v475, %v385
  %479 = vrot.lane.b32.xlu0 %v476, 32
  %v480 = vpop.permute.xlu0 %479
  %v482 = vmul.f32 %v475, %v480
  %484 = vrot.lane.b32.xlu0 %v482, 32
  %v485 = vpop.permute.xlu0 %484
  %v487 = vadd.f32 %v477, %v485
  %v488 = vtanh.pop %v487
  %490 = vrot.lane.b32.xlu0 %v488, 32
  %v491 = vpop.permute.xlu0 %490
  %v493 = vmul.f32 %v475, %v491
  %s494 = scalar_lea.vmem [#allocation2], 16
  %v495 = vld [vmem:[%s494] sm:$0xff]
  %497 = vrot.lane.b32.xlu0 %v493, 64
  %v498 = vpop.permute.xlu0 %497
  %v499 = vsel %vm289, %v498, 0
  %501 = vmatprep.subr.mxu0 0.0
  %502 = vmatpush1.msra.mxu0 0.0
  %503 = vmatprep.subr.mxu0 0.0
  %504 = vmatpush1.msra.mxu0 0.0
  %505 = vmatprep.subr.mxu0 0.0
  %506 = vmatpush1.msra.mxu0 0.0
  %507 = vmatprep.subr.mxu0 0.0
  %508 = vmatpush1.msra.mxu0 0.0
  %509 = vmatprep.subr.mxu0 0.0
  %510 = vmatpush1.msra.mxu0 0.0
  %511 = vmatprep.subr.mxu0 0.0
  %512 = vmatpush1.msra.mxu0 0.0
  %513 = vmatprep.subr.mxu0 0.0
  %514 = vmatpush1.msra.mxu0 0.0
  %515 = vmatprep.subr.mxu0 0.0
  %516 = vmatpush1.msra.mxu0 0.0
  %517 = vmatprep.subr.mxu0 0.0
  %518 = vmatpush1.msra.mxu0 0.0
  %519 = vmatprep.subr.mxu0 0.0
  %520 = vmatpush1.msra.mxu0 0.0
  %521 = vmatprep.subr.mxu0 0.0
  %522 = vmatpush1.msra.mxu0 0.0
  %523 = vmatprep.subr.mxu0 0.0
  %524 = vmatpush1.msra.mxu0 0.0
  %525 = vmatprep.subr.mxu0 0.0
  %526 = vmatpush1.msra.mxu0 %v285
  %527 = vmatprep.subr.mxu0 0.0
  %528 = vmatpush1.msra.mxu0 %v284
  %529 = vmatprep.subr.mxu0 0.0
  %530 = vmatpush1.msra.mxu0 %v283
  %531 = vmatprep.subr.mxu0 0.0
  %532 = vmatpush1.msra.mxu0 %v282
  %533 = vmatprep.subr.mxu0 0.0
  %534 = vmatpush2.msra.mxu0 0.0
  %535 = vmatprep.subr.mxu0 0.0
  %536 = vmatpush2.msra.mxu0 0.0
  %537 = vmatprep.subr.mxu0 0.0
  %538 = vmatpush2.msra.mxu0 0.0
  %539 = vmatprep.subr.mxu0 0.0
  %540 = vmatpush2.msra.mxu0 0.0
  %541 = vmatprep.subr.mxu0 0.0
  %542 = vmatpush2.msra.mxu0 0.0
  %543 = vmatprep.subr.mxu0 0.0
  %544 = vmatpush2.msra.mxu0 0.0
  %545 = vmatprep.subr.mxu0 0.0
  %546 = vmatpush2.msra.mxu0 0.0
  %547 = vmatprep.subr.mxu0 0.0
  %548 = vmatpush2.msra.mxu0 0.0
  %549 = vmatprep.subr.mxu0 0.0
  %550 = vmatpush2.msra.mxu0 0.0
  %551 = vmatprep.subr.mxu0 0.0
  %552 = vmatpush2.msra.mxu0 0.0
  %553 = vmatprep.subr.mxu0 0.0
  %554 = vmatpush2.msra.mxu0 0.0
  %555 = vmatprep.subr.mxu0 0.0
  %556 = vmatpush2.msra.mxu0 0.0
  %557 = vmatprep.subr.mxu0 0.0
  %558 = vmatpush2.msra.mxu0 0.0
  %559 = vmatprep.subr.mxu0 0.0
  %560 = vmatpush2.msra.mxu0 0.0
  %561 = vmatprep.subr.mxu0 0.0
  %562 = vmatpush2.msra.mxu0 0.0
  %563 = vmatprep.subr.mxu0 0.0
  %564 = vmatpush2.msra.mxu0 0.0
  %565 = vmatprep.mubr.f32.mxu0 0.0
  %566 = vmatmul.mubr.f32.gmra.mxu0 %v499
  %v567 = vpop.f32.mrf.mxu0
  %v568 = vadd.f32 0.0, %v567
  %v569 = vpop.f32.mrf.mxu0
  %570 = vdwg.mxu0
  %v571 = vadd.f32 %v495, %v568
  %v572 = vxor.u32 %v571, 2147483648
  %v573 = vmul.f32 %v572, 1.442695
  %v574 = vpow.pop %v573
  %v575 = vadd.f32 %v574, 1.0
  %v576 = vrcp.pop %v575
  %v577 = vmul.f32 1.0, %v576
  %v578 = vtanh.pop %v571
  %v579 = vmul.f32 %v577, %v487
  %581 = vrot.lane.b32.xlu0 %v578, 32
  %v582 = vpop.permute.xlu0 %581
  %v584 = vmul.f32 %v577, %v582
  %586 = vrot.lane.b32.xlu0 %v584, 32
  %v587 = vpop.permute.xlu0 %586
  %v589 = vadd.f32 %v579, %v587
  %v590 = vtanh.pop %v589
  %592 = vrot.lane.b32.xlu0 %v590, 32
  %v593 = vpop.permute.xlu0 %592
  %v595 = vmul.f32 %v577, %v593
  %s596 = scalar_lea.vmem [#allocation2], 24
  %v597 = vld [vmem:[%s596] sm:$0xff]
  %599 = vrot.lane.b32.xlu0 %v595, 64
  %v600 = vpop.permute.xlu0 %599
  %v601 = vsel %vm289, %v600, 0
  %603 = vmatprep.subr.mxu0 0.0
  %604 = vmatpush1.msra.mxu0 0.0
  %605 = vmatprep.subr.mxu0 0.0
  %606 = vmatpush1.msra.mxu0 0.0
  %607 = vmatprep.subr.mxu0 0.0
  %608 = vmatpush1.msra.mxu0 0.0
  %609 = vmatprep.subr.mxu0 0.0
  %610 = vmatpush1.msra.mxu0 0.0
  %611 = vmatprep.subr.mxu0 0.0
  %612 = vmatpush1.msra.mxu0 0.0
  %613 = vmatprep.subr.mxu0 0.0
  %614 = vmatpush1.msra.mxu0 0.0
  %615 = vmatprep.subr.mxu0 0.0
  %616 = vmatpush1.msra.mxu0 0.0
  %617 = vmatprep.subr.mxu0 0.0
  %618 = vmatpush1.msra.mxu0 0.0
  %619 = vmatprep.subr.mxu0 0.0
  %620 = vmatpush1.msra.mxu0 0.0
  %621 = vmatprep.subr.mxu0 0.0
  %622 = vmatpush1.msra.mxu0 0.0
  %623 = vmatprep.subr.mxu0 0.0
  %624 = vmatpush1.msra.mxu0 0.0
  %625 = vmatprep.subr.mxu0 0.0
  %626 = vmatpush1.msra.mxu0 0.0
  %627 = vmatprep.subr.mxu0 0.0
  %628 = vmatpush1.msra.mxu0 %v285
  %629 = vmatprep.subr.mxu0 0.0
  %630 = vmatpush1.msra.mxu0 %v284
  %631 = vmatprep.subr.mxu0 0.0
  %632 = vmatpush1.msra.mxu0 %v283
  %633 = vmatprep.subr.mxu0 0.0
  %634 = vmatpush1.msra.mxu0 %v282
  %635 = vmatprep.subr.mxu0 0.0
  %636 = vmatpush2.msra.mxu0 0.0
  %637 = vmatprep.subr.mxu0 0.0
  %638 = vmatpush2.msra.mxu0 0.0
  %639 = vmatprep.subr.mxu0 0.0
  %640 = vmatpush2.msra.mxu0 0.0
  %641 = vmatprep.subr.mxu0 0.0
  %642 = vmatpush2.msra.mxu0 0.0
  %643 = vmatprep.subr.mxu0 0.0
  %644 = vmatpush2.msra.mxu0 0.0
  %645 = vmatprep.subr.mxu0 0.0
  %646 = vmatpush2.msra.mxu0 0.0
  %647 = vmatprep.subr.mxu0 0.0
  %648 = vmatpush2.msra.mxu0 0.0
  %649 = vmatprep.subr.mxu0 0.0
  %650 = vmatpush2.msra.mxu0 0.0
  %651 = vmatprep.subr.mxu0 0.0
  %652 = vmatpush2.msra.mxu0 0.0
  %653 = vmatprep.subr.mxu0 0.0
  %654 = vmatpush2.msra.mxu0 0.0
  %655 = vmatprep.subr.mxu0 0.0
  %656 = vmatpush2.msra.mxu0 0.0
  %657 = vmatprep.subr.mxu0 0.0
  %658 = vmatpush2.msra.mxu0 0.0
  %659 = vmatprep.subr.mxu0 0.0
  %660 = vmatpush2.msra.mxu0 0.0
  %661 = vmatprep.subr.mxu0 0.0
  %662 = vmatpush2.msra.mxu0 0.0
  %663 = vmatprep.subr.mxu0 0.0
  %664 = vmatpush2.msra.mxu0 0.0
  %665 = vmatprep.subr.mxu0 0.0
  %666 = vmatpush2.msra.mxu0 0.0
  %667 = vmatprep.mubr.f32.mxu0 0.0
  %668 = vmatmul.mubr.f32.gmra.mxu0 %v601
  %v669 = vpop.f32.mrf.mxu0
  %v670 = vadd.f32 0.0, %v669
  %v671 = vpop.f32.mrf.mxu0
  %672 = vdwg.mxu0
  %v673 = vadd.f32 %v597, %v670
  %v674 = vxor.u32 %v673, 2147483648
  %v675 = vmul.f32 %v674, 1.442695
  %v676 = vpow.pop %v675
  %v677 = vadd.f32 %v676, 1.0
  %v678 = vrcp.pop %v677
  %v679 = vmul.f32 1.0, %v678
  %v680 = vtanh.pop %v673
  %v681 = vmul.f32 %v679, %v589
  %683 = vrot.lane.b32.xlu0 %v680, 32
  %v684 = vpop.permute.xlu0 %683
  %v686 = vmul.f32 %v679, %v684
  %688 = vrot.lane.b32.xlu0 %v686, 32
  %v689 = vpop.permute.xlu0 %688
  %v691 = vadd.f32 %v681, %v689
  %v692 = vtanh.pop %v691
  %694 = vrot.lane.b32.xlu0 %v692, 32
  %v695 = vpop.permute.xlu0 %694
  %v697 = vmul.f32 %v679, %v695
  %s698 = scalar_lea.vmem [#allocation2], 32
  %v699 = vld [vmem:[%s698] sm:$0xff]
  %701 = vrot.lane.b32.xlu0 %v697, 64
  %v702 = vpop.permute.xlu0 %701
  %v703 = vsel %vm289, %v702, 0
  %705 = vmatprep.subr.mxu0 0.0
  %706 = vmatpush1.msra.mxu0 0.0
  %707 = vmatprep.subr.mxu0 0.0
  %708 = vmatpush1.msra.mxu0 0.0
  %709 = vmatprep.subr.mxu0 0.0
  %710 = vmatpush1.msra.mxu0 0.0
  %711 = vmatprep.subr.mxu0 0.0
  %712 = vmatpush1.msra.mxu0 0.0
  %713 = vmatprep.subr.mxu0 0.0
  %714 = vmatpush1.msra.mxu0 0.0
  %715 = vmatprep.subr.mxu0 0.0
  %716 = vmatpush1.msra.mxu0 0.0
  %717 = vmatprep.subr.mxu0 0.0
  %718 = vmatpush1.msra.mxu0 0.0
  %719 = vmatprep.subr.mxu0 0.0
  %720 = vmatpush1.msra.mxu0 0.0
  %721 = vmatprep.subr.mxu0 0.0
  %722 = vmatpush1.msra.mxu0 0.0
  %723 = vmatprep.subr.mxu0 0.0
  %724 = vmatpush1.msra.mxu0 0.0
  %725 = vmatprep.subr.mxu0 0.0
  %726 = vmatpush1.msra.mxu0 0.0
  %727 = vmatprep.subr.mxu0 0.0
  %728 = vmatpush1.msra.mxu0 0.0
  %729 = vmatprep.subr.mxu0 0.0
  %730 = vmatpush1.msra.mxu0 %v285
  %731 = vmatprep.subr.mxu0 0.0
  %732 = vmatpush1.msra.mxu0 %v284
  %733 = vmatprep.subr.mxu0 0.0
  %734 = vmatpush1.msra.mxu0 %v283
  %735 = vmatprep.subr.mxu0 0.0
  %736 = vmatpush1.msra.mxu0 %v282
  %737 = vmatprep.subr.mxu0 0.0
  %738 = vmatpush2.msra.mxu0 0.0
  %739 = vmatprep.subr.mxu0 0.0
  %740 = vmatpush2.msra.mxu0 0.0
  %741 = vmatprep.subr.mxu0 0.0
  %742 = vmatpush2.msra.mxu0 0.0
  %743 = vmatprep.subr.mxu0 0.0
  %744 = vmatpush2.msra.mxu0 0.0
  %745 = vmatprep.subr.mxu0 0.0
  %746 = vmatpush2.msra.mxu0 0.0
  %747 = vmatprep.subr.mxu0 0.0
  %748 = vmatpush2.msra.mxu0 0.0
  %749 = vmatprep.subr.mxu0 0.0
  %750 = vmatpush2.msra.mxu0 0.0
  %751 = vmatprep.subr.mxu0 0.0
  %752 = vmatpush2.msra.mxu0 0.0
  %753 = vmatprep.subr.mxu0 0.0
  %754 = vmatpush2.msra.mxu0 0.0
  %755 = vmatprep.subr.mxu0 0.0
  %756 = vmatpush2.msra.mxu0 0.0
  %757 = vmatprep.subr.mxu0 0.0
  %758 = vmatpush2.msra.mxu0 0.0
  %759 = vmatprep.subr.mxu0 0.0
  %760 = vmatpush2.msra.mxu0 0.0
  %761 = vmatprep.subr.mxu0 0.0
  %762 = vmatpush2.msra.mxu0 0.0
  %763 = vmatprep.subr.mxu0 0.0
  %764 = vmatpush2.msra.mxu0 0.0
  %765 = vmatprep.subr.mxu0 0.0
  %766 = vmatpush2.msra.mxu0 0.0
  %767 = vmatprep.subr.mxu0 0.0
  %768 = vmatpush2.msra.mxu0 0.0
  %769 = vmatprep.mubr.f32.mxu0 0.0
  %770 = vmatmul.mubr.f32.gmra.mxu0 %v703
  %v771 = vpop.f32.mrf.mxu0
  %v772 = vadd.f32 0.0, %v771
  %v773 = vpop.f32.mrf.mxu0
  %774 = vdwg.mxu0
  %v775 = vadd.f32 %v699, %v772
  %v776 = vxor.u32 %v775, 2147483648
  %v777 = vmul.f32 %v776, 1.442695
  %v778 = vpow.pop %v777
  %v779 = vadd.f32 %v778, 1.0
  %v780 = vrcp.pop %v779
  %v781 = vmul.f32 1.0, %v780
  %v782 = vtanh.pop %v775
  %v783 = vmul.f32 %v781, %v691
  %785 = vrot.lane.b32.xlu0 %v782, 32
  %v786 = vpop.permute.xlu0 %785
  %v788 = vmul.f32 %v781, %v786
  %790 = vrot.lane.b32.xlu0 %v788, 32
  %v791 = vpop.permute.xlu0 %790
  %v793 = vadd.f32 %v783, %v791
  %v794 = vtanh.pop %v793
  %796 = vrot.lane.b32.xlu0 %v794, 32
  %v797 = vpop.permute.xlu0 %796
  %v799 = vmul.f32 %v781, %v797
  %s800 = scalar_lea.vmem [#allocation2], 40
  %v801 = vld [vmem:[%s800] sm:$0xff]
  %803 = vrot.lane.b32.xlu0 %v799, 64
  %v804 = vpop.permute.xlu0 %803
  %v805 = vsel %vm289, %v804, 0
  %807 = vmatprep.subr.mxu0 0.0
  %808 = vmatpush1.msra.mxu0 0.0
  %809 = vmatprep.subr.mxu0 0.0
  %810 = vmatpush1.msra.mxu0 0.0
  %811 = vmatprep.subr.mxu0 0.0
  %812 = vmatpush1.msra.mxu0 0.0
  %813 = vmatprep.subr.mxu0 0.0
  %814 = vmatpush1.msra.mxu0 0.0
  %815 = vmatprep.subr.mxu0 0.0
  %816 = vmatpush1.msra.mxu0 0.0
  %817 = vmatprep.subr.mxu0 0.0
  %818 = vmatpush1.msra.mxu0 0.0
  %819 = vmatprep.subr.mxu0 0.0
  %820 = vmatpush1.msra.mxu0 0.0
  %821 = vmatprep.subr.mxu0 0.0
  %822 = vmatpush1.msra.mxu0 0.0
  %823 = vmatprep.subr.mxu0 0.0
  %824 = vmatpush1.msra.mxu0 0.0
  %825 = vmatprep.subr.mxu0 0.0
  %826 = vmatpush1.msra.mxu0 0.0
  %827 = vmatprep.subr.mxu0 0.0
  %828 = vmatpush1.msra.mxu0 0.0
  %829 = vmatprep.subr.mxu0 0.0
  %830 = vmatpush1.msra.mxu0 0.0
  %831 = vmatprep.subr.mxu0 0.0
  %832 = vmatpush1.msra.mxu0 %v285
  %833 = vmatprep.subr.mxu0 0.0
  %834 = vmatpush1.msra.mxu0 %v284
  %835 = vmatprep.subr.mxu0 0.0
  %836 = vmatpush1.msra.mxu0 %v283
  %837 = vmatprep.subr.mxu0 0.0
  %838 = vmatpush1.msra.mxu0 %v282
  %839 = vmatprep.subr.mxu0 0.0
  %840 = vmatpush2.msra.mxu0 0.0
  %841 = vmatprep.subr.mxu0 0.0
  %842 = vmatpush2.msra.mxu0 0.0
  %843 = vmatprep.subr.mxu0 0.0
  %844 = vmatpush2.msra.mxu0 0.0
  %845 = vmatprep.subr.mxu0 0.0
  %846 = vmatpush2.msra.mxu0 0.0
  %847 = vmatprep.subr.mxu0 0.0
  %848 = vmatpush2.msra.mxu0 0.0
  %849 = vmatprep.subr.mxu0 0.0
  %850 = vmatpush2.msra.mxu0 0.0
  %851 = vmatprep.subr.mxu0 0.0
  %852 = vmatpush2.msra.mxu0 0.0
  %853 = vmatprep.subr.mxu0 0.0
  %854 = vmatpush2.msra.mxu0 0.0
  %855 = vmatprep.subr.mxu0 0.0
  %856 = vmatpush2.msra.mxu0 0.0
  %857 = vmatprep.subr.mxu0 0.0
  %858 = vmatpush2.msra.mxu0 0.0
  %859 = vmatprep.subr.mxu0 0.0
  %860 = vmatpush2.msra.mxu0 0.0
  %861 = vmatprep.subr.mxu0 0.0
  %862 = vmatpush2.msra.mxu0 0.0
  %863 = vmatprep.subr.mxu0 0.0
  %864 = vmatpush2.msra.mxu0 0.0
  %865 = vmatprep.subr.mxu0 0.0
  %866 = vmatpush2.msra.mxu0 0.0
  %867 = vmatprep.subr.mxu0 0.0
  %868 = vmatpush2.msra.mxu0 0.0
  %869 = vmatprep.subr.mxu0 0.0
  %870 = vmatpush2.msra.mxu0 0.0
  %871 = vmatprep.mubr.f32.mxu0 0.0
  %872 = vmatmul.mubr.f32.gmra.mxu0 %v805
  %v873 = vpop.f32.mrf.mxu0
  %v874 = vadd.f32 0.0, %v873
  %v875 = vpop.f32.mrf.mxu0
  %876 = vdwg.mxu0
  %v877 = vadd.f32 %v801, %v874
  %v878 = vxor.u32 %v877, 2147483648
  %v879 = vmul.f32 %v878, 1.442695
  %v880 = vpow.pop %v879
  %v881 = vadd.f32 %v880, 1.0
  %v882 = vrcp.pop %v881
  %v883 = vmul.f32 1.0, %v882
  %v884 = vtanh.pop %v877
  %v885 = vmul.f32 %v883, %v793
  %887 = vrot.lane.b32.xlu0 %v884, 32
  %v888 = vpop.permute.xlu0 %887
  %v890 = vmul.f32 %v883, %v888
  %892 = vrot.lane.b32.xlu0 %v890, 32
  %v893 = vpop.permute.xlu0 %892
  %v895 = vadd.f32 %v885, %v893
  %v896 = vtanh.pop %v895
  %898 = vrot.lane.b32.xlu0 %v896, 32
  %v899 = vpop.permute.xlu0 %898
  %v901 = vmul.f32 %v883, %v899
  %s902 = scalar_lea.vmem [#allocation2], 48
  %v903 = vld [vmem:[%s902] sm:$0xff]
  %905 = vrot.lane.b32.xlu0 %v901, 64
  %v906 = vpop.permute.xlu0 %905
  %v907 = vsel %vm289, %v906, 0
  %909 = vmatprep.subr.mxu0 0.0
  %910 = vmatpush1.msra.mxu0 0.0
  %911 = vmatprep.subr.mxu0 0.0
  %912 = vmatpush1.msra.mxu0 0.0
  %913 = vmatprep.subr.mxu0 0.0
  %914 = vmatpush1.msra.mxu0 0.0
  %915 = vmatprep.subr.mxu0 0.0
  %916 = vmatpush1.msra.mxu0 0.0
  %917 = vmatprep.subr.mxu0 0.0
  %918 = vmatpush1.msra.mxu0 0.0
  %919 = vmatprep.subr.mxu0 0.0
  %920 = vmatpush1.msra.mxu0 0.0
  %921 = vmatprep.subr.mxu0 0.0
  %922 = vmatpush1.msra.mxu0 0.0
  %923 = vmatprep.subr.mxu0 0.0
  %924 = vmatpush1.msra.mxu0 0.0
  %925 = vmatprep.subr.mxu0 0.0
  %926 = vmatpush1.msra.mxu0 0.0
  %927 = vmatprep.subr.mxu0 0.0
  %928 = vmatpush1.msra.mxu0 0.0
  %929 = vmatprep.subr.mxu0 0.0
  %930 = vmatpush1.msra.mxu0 0.0
  %931 = vmatprep.subr.mxu0 0.0
  %932 = vmatpush1.msra.mxu0 0.0
  %933 = vmatprep.subr.mxu0 0.0
  %934 = vmatpush1.msra.mxu0 %v285
  %935 = vmatprep.subr.mxu0 0.0
  %936 = vmatpush1.msra.mxu0 %v284
  %937 = vmatprep.subr.mxu0 0.0
  %938 = vmatpush1.msra.mxu0 %v283
  %939 = vmatprep.subr.mxu0 0.0
  %940 = vmatpush1.msra.mxu0 %v282
  %941 = vmatprep.subr.mxu0 0.0
  %942 = vmatpush2.msra.mxu0 0.0
  %943 = vmatprep.subr.mxu0 0.0
  %944 = vmatpush2.msra.mxu0 0.0
  %945 = vmatprep.subr.mxu0 0.0
  %946 = vmatpush2.msra.mxu0 0.0
  %947 = vmatprep.subr.mxu0 0.0
  %948 = vmatpush2.msra.mxu0 0.0
  %949 = vmatprep.subr.mxu0 0.0
  %950 = vmatpush2.msra.mxu0 0.0
  %951 = vmatprep.subr.mxu0 0.0
  %952 = vmatpush2.msra.mxu0 0.0
  %953 = vmatprep.subr.mxu0 0.0
  %954 = vmatpush2.msra.mxu0 0.0
  %955 = vmatprep.subr.mxu0 0.0
  %956 = vmatpush2.msra.mxu0 0.0
  %957 = vmatprep.subr.mxu0 0.0
  %958 = vmatpush2.msra.mxu0 0.0
  %959 = vmatprep.subr.mxu0 0.0
  %960 = vmatpush2.msra.mxu0 0.0
  %961 = vmatprep.subr.mxu0 0.0
  %962 = vmatpush2.msra.mxu0 0.0
  %963 = vmatprep.subr.mxu0 0.0
  %964 = vmatpush2.msra.mxu0 0.0
  %965 = vmatprep.subr.mxu0 0.0
  %966 = vmatpush2.msra.mxu0 0.0
  %967 = vmatprep.subr.mxu0 0.0
  %968 = vmatpush2.msra.mxu0 0.0
  %969 = vmatprep.subr.mxu0 0.0
  %970 = vmatpush2.msra.mxu0 0.0
  %971 = vmatprep.subr.mxu0 0.0
  %972 = vmatpush2.msra.mxu0 0.0
  %973 = vmatprep.mubr.f32.mxu0 0.0
  %974 = vmatmul.mubr.f32.gmra.mxu0 %v907
  %v975 = vpop.f32.mrf.mxu0
  %v976 = vadd.f32 0.0, %v975
  %v977 = vpop.f32.mrf.mxu0
  %978 = vdwg.mxu0
  %v979 = vadd.f32 %v903, %v976
  %v980 = vxor.u32 %v979, 2147483648
  %v981 = vmul.f32 %v980, 1.442695
  %v982 = vpow.pop %v981
  %v983 = vadd.f32 %v982, 1.0
  %v984 = vrcp.pop %v983
  %v985 = vmul.f32 1.0, %v984
  %v986 = vtanh.pop %v979
  %v987 = vmul.f32 %v985, %v895
  %989 = vrot.lane.b32.xlu0 %v986, 32
  %v990 = vpop.permute.xlu0 %989
  %v992 = vmul.f32 %v985, %v990
  %994 = vrot.lane.b32.xlu0 %v992, 32
  %v995 = vpop.permute.xlu0 %994
  %v997 = vadd.f32 %v987, %v995
  %v998 = vtanh.pop %v997
  %1000 = vrot.lane.b32.xlu0 %v998, 32
  %v1001 = vpop.permute.xlu0 %1000
  %v1003 = vmul.f32 %v985, %v1001
  %s1004 = scalar_lea.vmem [#allocation2], 56
  %v1005 = vld [vmem:[%s1004] sm:$0xff]
  %1007 = vrot.lane.b32.xlu0 %v1003, 64
  %v1008 = vpop.permute.xlu0 %1007
  %v1009 = vsel %vm289, %v1008, 0
  %1011 = vmatprep.subr.mxu0 0.0
  %1012 = vmatpush1.msra.mxu0 0.0
  %1013 = vmatprep.subr.mxu0 0.0
  %1014 = vmatpush1.msra.mxu0 0.0
  %1015 = vmatprep.subr.mxu0 0.0
  %1016 = vmatpush1.msra.mxu0 0.0
  %1017 = vmatprep.subr.mxu0 0.0
  %1018 = vmatpush1.msra.mxu0 0.0
  %1019 = vmatprep.subr.mxu0 0.0
  %1020 = vmatpush1.msra.mxu0 0.0
  %1021 = vmatprep.subr.mxu0 0.0
  %1022 = vmatpush1.msra.mxu0 0.0
  %1023 = vmatprep.subr.mxu0 0.0
  %1024 = vmatpush1.msra.mxu0 0.0
  %1025 = vmatprep.subr.mxu0 0.0
  %1026 = vmatpush1.msra.mxu0 0.0
  %1027 = vmatprep.subr.mxu0 0.0
  %1028 = vmatpush1.msra.mxu0 0.0
  %1029 = vmatprep.subr.mxu0 0.0
  %1030 = vmatpush1.msra.mxu0 0.0
  %1031 = vmatprep.subr.mxu0 0.0
  %1032 = vmatpush1.msra.mxu0 0.0
  %1033 = vmatprep.subr.mxu0 0.0
  %1034 = vmatpush1.msra.mxu0 0.0
  %1035 = vmatprep.subr.mxu0 0.0
  %1036 = vmatpush1.msra.mxu0 %v285
  %1037 = vmatprep.subr.mxu0 0.0
  %1038 = vmatpush1.msra.mxu0 %v284
  %1039 = vmatprep.subr.mxu0 0.0
  %1040 = vmatpush1.msra.mxu0 %v283
  %1041 = vmatprep.subr.mxu0 0.0
  %1042 = vmatpush1.msra.mxu0 %v282
  %1043 = vmatprep.subr.mxu0 0.0
  %1044 = vmatpush2.msra.mxu0 0.0
  %1045 = vmatprep.subr.mxu0 0.0
  %1046 = vmatpush2.msra.mxu0 0.0
  %1047 = vmatprep.subr.mxu0 0.0
  %1048 = vmatpush2.msra.mxu0 0.0
  %1049 = vmatprep.subr.mxu0 0.0
  %1050 = vmatpush2.msra.mxu0 0.0
  %1051 = vmatprep.subr.mxu0 0.0
  %1052 = vmatpush2.msra.mxu0 0.0
  %1053 = vmatprep.subr.mxu0 0.0
  %1054 = vmatpush2.msra.mxu0 0.0
  %1055 = vmatprep.subr.mxu0 0.0
  %1056 = vmatpush2.msra.mxu0 0.0
  %1057 = vmatprep.subr.mxu0 0.0
  %1058 = vmatpush2.msra.mxu0 0.0
  %1059 = vmatprep.subr.mxu0 0.0
  %1060 = vmatpush2.msra.mxu0 0.0
  %1061 = vmatprep.subr.mxu0 0.0
  %1062 = vmatpush2.msra.mxu0 0.0
  %1063 = vmatprep.subr.mxu0 0.0
  %1064 = vmatpush2.msra.mxu0 0.0
  %1065 = vmatprep.subr.mxu0 0.0
  %1066 = vmatpush2.msra.mxu0 0.0
  %1067 = vmatprep.subr.mxu0 0.0
  %1068 = vmatpush2.msra.mxu0 0.0
  %1069 = vmatprep.subr.mxu0 0.0
  %1070 = vmatpush2.msra.mxu0 0.0
  %1071 = vmatprep.subr.mxu0 0.0
  %1072 = vmatpush2.msra.mxu0 0.0
  %1073 = vmatprep.subr.mxu0 0.0
  %1074 = vmatpush2.msra.mxu0 0.0
  %1075 = vmatprep.mubr.f32.mxu0 0.0
  %1076 = vmatmul.mubr.f32.gmra.mxu0 %v1009
  %v1077 = vpop.f32.mrf.mxu0
  %v1078 = vadd.f32 0.0, %v1077
  %v1079 = vpop.f32.mrf.mxu0
  %1080 = vdwg.mxu0
  %v1081 = vadd.f32 %v1005, %v1078
  %v1082 = vxor.u32 %v1081, 2147483648
  %v1083 = vmul.f32 %v1082, 1.442695
  %v1084 = vpow.pop %v1083
  %v1085 = vadd.f32 %v1084, 1.0
  %v1086 = vrcp.pop %v1085
  %v1087 = vmul.f32 1.0, %v1086
  %v1088 = vtanh.pop %v1081
  %v1089 = vmul.f32 %v1087, %v997
  %1091 = vrot.lane.b32.xlu0 %v1088, 32
  %v1092 = vpop.permute.xlu0 %1091
  %v1094 = vmul.f32 %v1087, %v1092
  %1096 = vrot.lane.b32.xlu0 %v1094, 32
  %v1097 = vpop.permute.xlu0 %1096
  %v1099 = vadd.f32 %v1089, %v1097
  %v1100 = vtanh.pop %v1099
  %1102 = vrot.lane.b32.xlu0 %v1100, 32
  %v1103 = vpop.permute.xlu0 %1102
  %v1105 = vmul.f32 %v1087, %v1103
  %1107 = vrot.lane.b32.xlu0 %v1105, 64
  %v1108 = vpop.permute.xlu0 %1107
  %1110 = vst.msk [vmem:[#allocation3] sm:$0xff] %vm289, %v1108
  %1112 = vrot.lane.b32.xlu0 %v1099, 96
  %v1113 = vpop.permute.xlu0 %1112
  %1115 = vst.msk [vmem:[#allocation4] sm:$0xff] %vm289, %v1113
  // Predicated region
  $region38: #{tpu_custom_call.1} parent=0 // pred_check
    %p1116 = pneg %p31
  $region39: #{tpu_custom_call.1} parent=0 // pred_check_branch
    %1118 = sbr.rel (%p1116) target = $region41
  $region40: #{tpu_custom_call.1} parent=0 // pred_region
    %v1119 = vld [vmem:[%s6] sm:$0x1]
    %v1121 = vlaneseq
    %v1122 = vshrl.u32 %v1121, 7
    %v1123 = vsub.s32 0, %v1122
    %v1124 = vrot.slane %v1119, %v1123
    %1125 = vrot.lane.b32.xlu0 %v1124, 64
    %v1126 = vpop.permute.xlu0 %1125
    %v1128 = vmul.f32 %v1105, %v1126
    %1130 = vrot.lane.b32.xlu0 %v1128, 64
    %v1131 = vpop.permute.xlu0 %1130
    %v1133 = vsel %vm289, %v1131, 0.0
    %1134 = vadd.xlane.f32.xlu0 %v1133
    %v1135 = vpop.xlane.xlu0 %1134
    %v1136 = vld [vmem:[#allocation5] sm:$0x1]
    %v1138 = vlaneseq
    %v1139 = vshrl.u32 %v1138, 7
    %v1140 = vsub.s32 0, %v1139
    %v1141 = vrot.slane %v1136, %v1140
    %v1143 = vadd.f32 %v1135, %v1141
    %vm1144 = vcmask 7168
    %1145 = vst.msk [vmem:[%s8] sm:$0xff] %vm1144, %v1143
  $region41: #{tpu_custom_call.1} parent=0 // pred_fallthru
    _
  // Predicated region
  $region42: #{tpu_custom_call.1} parent=0 // pred_check
    _
  $region43: #{tpu_custom_call.1} parent=0 // pred_check_branch
    %1147 = sbr.rel (0) target = $region45
  $region44: #{tpu_custom_call.1} parent=0 // pred_region
    _
  $region45: #{tpu_custom_call.1} parent=0 // pred_fallthru
    _
  // Predicated region
  $region46: #{tpu_custom_call.1} parent=0 // pred_check
    _
  $region47: #{tpu_custom_call.1} parent=0 // pred_check_branch
    %1149 = sbr.rel (0) target = $region49
  $region48: #{tpu_custom_call.1} parent=0 // pred_region
    _
  $region49: #{tpu_custom_call.1} parent=0 // pred_fallthru
    _

</llo_original>
